<compile_context>
chip_gen: v5e
topology: v5e:2x2
jax: 0.10.0
libtpu: 0.0.40
codegen_flags: <defaults>
</compile_context>

<pallas_src>
import jax
import jax.numpy as jnp
from jax.experimental import pallas as pl
from jax.experimental.pallas import tpu as pltpu


# ---------------- Pallas kernel ----------------

def _make_kernel(c_mid, after_relu):
    def kernel(x_ref, y_ref, g_ref, s_ref, wf_ref, b_ref, o_ref):
        # x_ref/y_ref/o_ref: (1, C, N)   g_ref: (N, 2N)   s_ref: (9, N, N)
        # wf_ref: (2M+1, 27C)            b_ref: (2M+1, 1)
        x = x_ref[0]                                       # (C, N)
        y = y_ref[0]
        if after_relu:
            x = jnp.maximum(x, 0.0)
            y = jnp.maximum(y, 0.0)
        n = x.shape[-1]

        # --- |fft2(x - y)| as an exact DFT, one fused [Re | Im] matmul ---
        d = x - y                                          # (C, N)
        yc = jnp.dot(d, g_ref[...], preferred_element_type=jnp.float32)   # (C, 2N)
        yr = yc[:, :n]
        yi = yc[:, n:]
        fmag = jnp.sqrt(yr * yr + yi * yi)                 # (C, N)

        # --- shared im2col of [x ; y ; fmag]: 9 shift matmuls (zero pad baked in) ---
        stacked = jnp.concatenate([x, y, fmag], axis=0)    # (3C, N)
        pieces = [
            jnp.dot(stacked, s_ref[t], preferred_element_type=jnp.float32)
            for t in range(9)
        ]
        a_all = jnp.concatenate(pieces, axis=0)            # (27C, N)

        # --- three Conv3x3 + folded BN fused into ONE lane-dense matmul ---
        conv = jnp.dot(wf_ref[...], a_all, preferred_element_type=jnp.float32)
        conv = conv + b_ref[...]                           # (2M+1, N)
        x_k = conv[0:c_mid]                                # (M, N)
        y_q = conv[c_mid:2 * c_mid]                        # (M, N)
        z_fr = conv[2 * c_mid:2 * c_mid + 1]               # (1, N)  = sum_c BN_f(conv_f(fmag))

        z_sp = jnp.sum(x_k * y_q, axis=0, keepdims=True)   # (1, N)
        sim = (1.0 / (1.0 + jnp.exp(-z_sp))) * (1.0 / (1.0 + jnp.exp(-z_fr)))

        # (1 - sim) * x + sim * y
        o_ref[0] = (x + sim * (y - x)).astype(o_ref.dtype)

    return kernel


# ---------------- constant-matrix builders (host side) ----------------

def _dft_matrix(h, w):
    """[Re | Im] of G, where G[h*W+w, k*W+l] = exp(-2i*pi*(k*h/H + l*w/W)).  (N, 2N)."""
    hi = jnp.arange(h)
    wi = jnp.arange(w)
    fh = jnp.exp(-2j * jnp.pi * (jnp.outer(hi, hi) % h).astype(jnp.float32) / h)
    fw = jnp.exp(-2j * jnp.pi * (jnp.outer(wi, wi) % w).astype(jnp.float32) / w)
    g = jnp.kron(fh, fw)                                   # (N, N) complex64
    return jnp.concatenate([jnp.real(g), jnp.imag(g)], axis=1).astype(jnp.float32)


def _shift_matrices(h, w):
    """9 (N, N) 0/1 matrices; A @ S_t shifts flattened pixels by (dh, dw) with zero pad."""
    n = h * w
    hh = jnp.arange(h)[:, None]
    ww = jnp.arange(w)[None, :]
    rows = jnp.arange(n)[:, None]
    mats = []
    for dh in (-1, 0, 1):          # tap t = (dh+1)*3 + (dw+1) matches OIHW flattening
        for dw in (-1, 0, 1):
            sh = hh + dh
            sw = ww + dw
            valid = ((sh >= 0) & (sh < h) & (sw >= 0) & (sw < w)).reshape(-1)
            src = (jnp.clip(sh, 0, h - 1) * w + jnp.clip(sw, 0, w - 1)).reshape(-1)
            m = (rows == src[None, :]) & valid[None, :]
            mats.append(m.astype(jnp.float32))
    return jnp.stack(mats, axis=0)                         # (9, N, N)


# ---------------- wrapper ----------------

def pag_fm2(x, y, kx, sx, bx, ky, sy, by, kf, sf, bf, after_relu=False):
    """PagFM2.forward (eval mode, with_channel=False).

    x, y : (B, C, H, W) float32, same shape (the module's fft2(x)-fft2(y) already
           forces matching sizes, so every F.interpolate in the forward is the identity).
    k*   : (M, C, 3, 3) conv weights (no bias).
    s*/b*: folded eval BatchNorm, s = gamma/sqrt(var+eps), b = beta - mean*s, shape (M,).
    """
    b, c, h, w = x.shape
    assert y.shape == x.shape
    m = kx.shape[0]
    n = h * w

    # Fused conv weight: rows [0,M)=f_x, [M,2M)=f_y, last row = channel-summed f_freq.
    def taps(k, s):                       # (M,C,3,3) -> (M, 9, C), BN scale folded in
        return (s[:, None, None, None] * k).reshape(m, c, 9).transpose(0, 2, 1)

    wf = jnp.zeros((2 * m + 1, 9, 3 * c), jnp.float32)
    wf = wf.at[0:m, :, 0:c].set(taps(kx, sx))
    wf = wf.at[m:2 * m, :, c:2 * c].set(taps(ky, sy))
    wf = wf.at[2 * m, :, 2 * c:3 * c].set(
        jnp.einsum('o,oihw->ihw', sf, kf).reshape(c, 9).T)
    wf = wf.reshape(2 * m + 1, 27 * c).astype(jnp.float32)
    bias = jnp.concatenate([bx, by, jnp.sum(bf)[None]]).reshape(2 * m + 1, 1)
    bias = bias.astype(jnp.float32)

    g = _dft_matrix(h, w)                 # (N, 2N)
    s_mats = _shift_matrices(h, w)        # (9, N, N)

    x2 = x.reshape(b, c, n)               # free contiguous views (no transpose)
    y2 = y.reshape(b, c, n)

    out = pl.pallas_call(
        _make_kernel(m, after_relu),
        out_shape=jax.ShapeDtypeStruct((b, c, n), jnp.float32),
        grid_spec=pltpu.PrefetchScalarGridSpec(
            num_scalar_prefetch=0,
            grid=(b,),
            in_specs=[
                pl.BlockSpec((1, c, n), lambda i: (i, 0, 0)),        # x
                pl.BlockSpec((1, c, n), lambda i: (i, 0, 0)),        # y
                pl.BlockSpec((n, 2 * n), lambda i: (0, 0)),          # DFT [Re|Im]
                pl.BlockSpec((9, n, n), lambda i: (0, 0, 0)),        # shift matrices
                pl.BlockSpec((2 * m + 1, 27 * c), lambda i: (0, 0)), # fused conv weight
                pl.BlockSpec((2 * m + 1, 1), lambda i: (0, 0)),      # fused bias
            ],
            out_specs=pl.BlockSpec((1, c, n), lambda i: (i, 0, 0)),
        ),
        compiler_params=pltpu.CompilerParams(
            dimension_semantics=("parallel",)),
    )(x2, y2, g, s_mats, wf, bias)

    return out.reshape(b, c, h, w)


# ---------------- pure-JAX reference for verification ----------------

def reference(x, y, kx, sx, bx, ky, sy, by, kf, sf, bf, after_relu=False):
    if after_relu:
        x = jnp.maximum(x, 0.0)
        y = jnp.maximum(y, 0.0)

    def conv_bn(a, k, s, bb):
        o = jax.lax.conv_general_dilated(
            a, k, window_strides=(1, 1), padding='SAME',
            dimension_numbers=('NCHW', 'OIHW', 'NCHW'),
            precision=jax.lax.Precision.HIGHEST)
        return o * s[None, :, None, None] + bb[None, :, None, None]

    y_q = conv_bn(y, ky, sy, by)                 # interpolate == identity (same size)
    x_k = conv_bn(x, kx, sx, bx)
    freq = jnp.abs(jnp.fft.fft2(x) - jnp.fft.fft2(y))
    ff = conv_bn(freq, kf, sf, bf)               # interpolate == identity
    sp = jax.nn.sigmoid(jnp.sum(x_k * y_q, axis=1, keepdims=True))
    fs = jax.nn.sigmoid(jnp.sum(ff, axis=1, keepdims=True))
    sim = sp * fs
    return (1.0 - sim) * x + sim * y


# ---------------- main ----------------

if __name__ == "__main__":
    key = jax.random.PRNGKey(0)
    b, c, m, h, w = 2, 8, 8, 16, 16              # in_channels=8, mid_channels=8
    ks = jax.random.split(key, 20)

    x = jax.random.normal(ks[0], (b, c, h, w), jnp.float32)
    y = jax.random.normal(ks[1], (b, c, h, w), jnp.float32)

    def conv_w(k, scale):
        return jax.random.normal(k, (m, c, 3, 3), jnp.float32) * scale

    kx = conv_w(ks[2], 0.5 * (2.0 / (9 * c)) ** 0.5)
    ky = conv_w(ks[3], 0.5 * (2.0 / (9 * c)) ** 0.5)
    # small scale keeps the freq-branch sigmoid out of saturation (|FFT| is O(10))
    kf = conv_w(ks[4], 0.02 * (2.0 / (9 * c)) ** 0.5)

    def bn(k1, k2, k3, k4):
        gamma = 1.0 + 0.1 * jax.random.normal(k1, (m,), jnp.float32)
        beta = 0.1 * jax.random.normal(k2, (m,), jnp.float32)
        mean = 0.1 * jax.random.normal(k3, (m,), jnp.float32)
        var = jnp.abs(jax.random.normal(k4, (m,), jnp.float32)) + 0.5
        s = gamma / jnp.sqrt(var + 1e-5)
        return s, beta - mean * s

    sx, bx = bn(ks[5], ks[6], ks[7], ks[8])
    sy, by = bn(ks[9], ks[10], ks[11], ks[12])
    sf, bf = bn(ks[13], ks[14], ks[15], ks[16])

    out = pag_fm2(x, y, kx, sx, bx, ky, sy, by, kf, sf, bf)
    out = jax.block_until_ready(out)

    ref = reference(x, y, kx, sx, bx, ky, sy, by, kf, sf, bf)
    assert out.shape == (b, c, h, w)
    assert jnp.allclose(out, ref, atol=5e-3, rtol=5e-3), "mismatch vs reference"

    print("KERNEL_OK")
</pallas_src>

<mosaic_0001>
module attributes {stable_mosaic.version = 11 : i64} {
  func.func @kernel(%arg0: i32, %arg1: memref<1x8x256xf32, #tpu.memory_space<vmem>>, %arg2: memref<1x8x256xf32, #tpu.memory_space<vmem>>, %arg3: memref<256x512xf32, #tpu.memory_space<vmem>>, %arg4: memref<9x256x256xf32, #tpu.memory_space<vmem>>, %arg5: memref<17x216xf32, #tpu.memory_space<vmem>>, %arg6: memref<17x1xf32, #tpu.memory_space<vmem>>, %arg7: memref<1x8x256xf32, #tpu.memory_space<vmem>>) attributes {dimension_semantics = [#tpu.dimension_semantics<parallel>], iteration_bounds = array<i64: 2>, scalar_prefetch = 0 : i64, scratch_operands = 0 : i64, tpu.core_type = #tpu.core_type<tc>, window_params = [{transform_indices = @transform_0, window_bounds = array<i64: 1, 8, 256>}, {transform_indices = @transform_1, window_bounds = array<i64: 1, 8, 256>}, {pipeline_mode = #tpu.pipeline_mode<synchronous>, transform_indices = @transform_2, window_bounds = array<i64: 256, 512>}, {pipeline_mode = #tpu.pipeline_mode<synchronous>, transform_indices = @transform_3, window_bounds = array<i64: 9, 256, 256>}, {pipeline_mode = #tpu.pipeline_mode<synchronous>, transform_indices = @transform_4, window_bounds = array<i64: 17, 216>}, {pipeline_mode = #tpu.pipeline_mode<synchronous>, transform_indices = @transform_5, window_bounds = array<i64: 17, 1>}, {transform_indices = @transform_6, window_bounds = array<i64: 1, 8, 256>}]} {
    %c0 = arith.constant 0 : index
    %c0_0 = arith.constant 0 : index
    %c0_1 = arith.constant 0 : index
    %0 = vector.load %arg1[%c0, %c0_0, %c0_1] : memref<1x8x256xf32, #tpu.memory_space<vmem>>, vector<1x8x256xf32>
    %1 = vector.shape_cast %0 : vector<1x8x256xf32> to vector<8x256xf32>
    %c0_2 = arith.constant 0 : index
    %c0_3 = arith.constant 0 : index
    %c0_4 = arith.constant 0 : index
    %2 = vector.load %arg2[%c0_2, %c0_3, %c0_4] : memref<1x8x256xf32, #tpu.memory_space<vmem>>, vector<1x8x256xf32>
    %3 = vector.shape_cast %2 : vector<1x8x256xf32> to vector<8x256xf32>
    %4 = arith.subf %1, %3 : vector<8x256xf32>
    %c0_5 = arith.constant 0 : index
    %c0_6 = arith.constant 0 : index
    %5 = vector.load %arg3[%c0_5, %c0_6] : memref<256x512xf32, #tpu.memory_space<vmem>>, vector<256x512xf32>
    %cst = arith.constant dense<0.000000e+00> : vector<8x512xf32>
    %6 = tpu.matmul %4, %5, %cst {dimension_numbers = #tpu.dot_dimension_numbers<[1], [0], [0], [1], [0, 0, 1, 1], [], []>} : vector<8x256xf32>, vector<256x512xf32>, vector<8x512xf32> -> vector<8x512xf32>
    %7 = vector.extract_strided_slice %6 {offsets = [0, 0], sizes = [8, 256], strides = [1, 1]} : vector<8x512xf32> to vector<8x256xf32>
    %8 = vector.extract_strided_slice %6 {offsets = [0, 256], sizes = [8, 256], strides = [1, 1]} : vector<8x512xf32> to vector<8x256xf32>
    %9 = arith.mulf %7, %7 : vector<8x256xf32>
    %10 = arith.mulf %8, %8 : vector<8x256xf32>
    %11 = arith.addf %9, %10 : vector<8x256xf32>
    %12 = math.sqrt %11 : vector<8x256xf32>
    %13 = tpu.concatenate %1, %3, %12 in 0 : vector<8x256xf32>, vector<8x256xf32>, vector<8x256xf32> -> vector<24x256xf32>
    %c0_7 = arith.constant 0 : index
    %c0_8 = arith.constant 0 : index
    %c0_9 = arith.constant 0 : index
    %14 = vector.load %arg4[%c0_7, %c0_8, %c0_9] : memref<9x256x256xf32, #tpu.memory_space<vmem>>, vector<1x256x256xf32>
    %15 = vector.shape_cast %14 : vector<1x256x256xf32> to vector<256x256xf32>
    %cst_10 = arith.constant dense<0.000000e+00> : vector<24x256xf32>
    %16 = tpu.matmul %13, %15, %cst_10 {dimension_numbers = #tpu.dot_dimension_numbers<[1], [0], [0], [1], [0, 0, 1, 1], [], []>} : vector<24x256xf32>, vector<256x256xf32>, vector<24x256xf32> -> vector<24x256xf32>
    %c1 = arith.constant 1 : index
    %c0_11 = arith.constant 0 : index
    %c0_12 = arith.constant 0 : index
    %17 = vector.load %arg4[%c1, %c0_11, %c0_12] : memref<9x256x256xf32, #tpu.memory_space<vmem>>, vector<1x256x256xf32>
    %18 = vector.shape_cast %17 : vector<1x256x256xf32> to vector<256x256xf32>
    %cst_13 = arith.constant dense<0.000000e+00> : vector<24x256xf32>
    %19 = tpu.matmul %13, %18, %cst_13 {dimension_numbers = #tpu.dot_dimension_numbers<[1], [0], [0], [1], [0, 0, 1, 1], [], []>} : vector<24x256xf32>, vector<256x256xf32>, vector<24x256xf32> -> vector<24x256xf32>
    %c2 = arith.constant 2 : index
    %c0_14 = arith.constant 0 : index
    %c0_15 = arith.constant 0 : index
    %20 = vector.load %arg4[%c2, %c0_14, %c0_15] : memref<9x256x256xf32, #tpu.memory_space<vmem>>, vector<1x256x256xf32>
    %21 = vector.shape_cast %20 : vector<1x256x256xf32> to vector<256x256xf32>
    %cst_16 = arith.constant dense<0.000000e+00> : vector<24x256xf32>
    %22 = tpu.matmul %13, %21, %cst_16 {dimension_numbers = #tpu.dot_dimension_numbers<[1], [0], [0], [1], [0, 0, 1, 1], [], []>} : vector<24x256xf32>, vector<256x256xf32>, vector<24x256xf32> -> vector<24x256xf32>
    %c3 = arith.constant 3 : index
    %c0_17 = arith.constant 0 : index
    %c0_18 = arith.constant 0 : index
    %23 = vector.load %arg4[%c3, %c0_17, %c0_18] : memref<9x256x256xf32, #tpu.memory_space<vmem>>, vector<1x256x256xf32>
    %24 = vector.shape_cast %23 : vector<1x256x256xf32> to vector<256x256xf32>
    %cst_19 = arith.constant dense<0.000000e+00> : vector<24x256xf32>
    %25 = tpu.matmul %13, %24, %cst_19 {dimension_numbers = #tpu.dot_dimension_numbers<[1], [0], [0], [1], [0, 0, 1, 1], [], []>} : vector<24x256xf32>, vector<256x256xf32>, vector<24x256xf32> -> vector<24x256xf32>
    %c4 = arith.constant 4 : index
    %c0_20 = arith.constant 0 : index
    %c0_21 = arith.constant 0 : index
    %26 = vector.load %arg4[%c4, %c0_20, %c0_21] : memref<9x256x256xf32, #tpu.memory_space<vmem>>, vector<1x256x256xf32>
    %27 = vector.shape_cast %26 : vector<1x256x256xf32> to vector<256x256xf32>
    %cst_22 = arith.constant dense<0.000000e+00> : vector<24x256xf32>
    %28 = tpu.matmul %13, %27, %cst_22 {dimension_numbers = #tpu.dot_dimension_numbers<[1], [0], [0], [1], [0, 0, 1, 1], [], []>} : vector<24x256xf32>, vector<256x256xf32>, vector<24x256xf32> -> vector<24x256xf32>
    %c5 = arith.constant 5 : index
    %c0_23 = arith.constant 0 : index
    %c0_24 = arith.constant 0 : index
    %29 = vector.load %arg4[%c5, %c0_23, %c0_24] : memref<9x256x256xf32, #tpu.memory_space<vmem>>, vector<1x256x256xf32>
    %30 = vector.shape_cast %29 : vector<1x256x256xf32> to vector<256x256xf32>
    %cst_25 = arith.constant dense<0.000000e+00> : vector<24x256xf32>
    %31 = tpu.matmul %13, %30, %cst_25 {dimension_numbers = #tpu.dot_dimension_numbers<[1], [0], [0], [1], [0, 0, 1, 1], [], []>} : vector<24x256xf32>, vector<256x256xf32>, vector<24x256xf32> -> vector<24x256xf32>
    %c6 = arith.constant 6 : index
    %c0_26 = arith.constant 0 : index
    %c0_27 = arith.constant 0 : index
    %32 = vector.load %arg4[%c6, %c0_26, %c0_27] : memref<9x256x256xf32, #tpu.memory_space<vmem>>, vector<1x256x256xf32>
    %33 = vector.shape_cast %32 : vector<1x256x256xf32> to vector<256x256xf32>
    %cst_28 = arith.constant dense<0.000000e+00> : vector<24x256xf32>
    %34 = tpu.matmul %13, %33, %cst_28 {dimension_numbers = #tpu.dot_dimension_numbers<[1], [0], [0], [1], [0, 0, 1, 1], [], []>} : vector<24x256xf32>, vector<256x256xf32>, vector<24x256xf32> -> vector<24x256xf32>
    %c7 = arith.constant 7 : index
    %c0_29 = arith.constant 0 : index
    %c0_30 = arith.constant 0 : index
    %35 = vector.load %arg4[%c7, %c0_29, %c0_30] : memref<9x256x256xf32, #tpu.memory_space<vmem>>, vector<1x256x256xf32>
    %36 = vector.shape_cast %35 : vector<1x256x256xf32> to vector<256x256xf32>
    %cst_31 = arith.constant dense<0.000000e+00> : vector<24x256xf32>
    %37 = tpu.matmul %13, %36, %cst_31 {dimension_numbers = #tpu.dot_dimension_numbers<[1], [0], [0], [1], [0, 0, 1, 1], [], []>} : vector<24x256xf32>, vector<256x256xf32>, vector<24x256xf32> -> vector<24x256xf32>
    %c8 = arith.constant 8 : index
    %c0_32 = arith.constant 0 : index
    %c0_33 = arith.constant 0 : index
    %38 = vector.load %arg4[%c8, %c0_32, %c0_33] : memref<9x256x256xf32, #tpu.memory_space<vmem>>, vector<1x256x256xf32>
    %39 = vector.shape_cast %38 : vector<1x256x256xf32> to vector<256x256xf32>
    %cst_34 = arith.constant dense<0.000000e+00> : vector<24x256xf32>
    %40 = tpu.matmul %13, %39, %cst_34 {dimension_numbers = #tpu.dot_dimension_numbers<[1], [0], [0], [1], [0, 0, 1, 1], [], []>} : vector<24x256xf32>, vector<256x256xf32>, vector<24x256xf32> -> vector<24x256xf32>
    %41 = tpu.concatenate %16, %19, %22, %25, %28, %31, %34, %37, %40 in 0 : vector<24x256xf32>, vector<24x256xf32>, vector<24x256xf32>, vector<24x256xf32>, vector<24x256xf32>, vector<24x256xf32>, vector<24x256xf32>, vector<24x256xf32>, vector<24x256xf32> -> vector<216x256xf32>
    %c0_35 = arith.constant 0 : index
    %c0_36 = arith.constant 0 : index
    %42 = vector.load %arg5[%c0_35, %c0_36] : memref<17x216xf32, #tpu.memory_space<vmem>>, vector<17x216xf32>
    %cst_37 = arith.constant dense<0.000000e+00> : vector<17x256xf32>
    %43 = tpu.matmul %42, %41, %cst_37 {dimension_numbers = #tpu.dot_dimension_numbers<[1], [0], [0], [1], [0, 0, 1, 1], [], []>} : vector<17x216xf32>, vector<216x256xf32>, vector<17x256xf32> -> vector<17x256xf32>
    %c0_38 = arith.constant 0 : index
    %c0_39 = arith.constant 0 : index
    %44 = vector.load %arg6[%c0_38, %c0_39] : memref<17x1xf32, #tpu.memory_space<vmem>>, vector<17x1xf32>
    %45 = vector.broadcast %44 : vector<17x1xf32> to vector<17x256xf32>
    %46 = arith.addf %43, %45 : vector<17x256xf32>
    %47 = vector.extract_strided_slice %46 {offsets = [0, 0], sizes = [8, 256], strides = [1, 1]} : vector<17x256xf32> to vector<8x256xf32>
    %48 = vector.extract_strided_slice %46 {offsets = [8, 0], sizes = [8, 256], strides = [1, 1]} : vector<17x256xf32> to vector<8x256xf32>
    %49 = vector.extract_strided_slice %46 {offsets = [16, 0], sizes = [1, 256], strides = [1, 1]} : vector<17x256xf32> to vector<1x256xf32>
    %50 = arith.mulf %47, %48 : vector<8x256xf32>
    %cst_40 = arith.constant dense<0.000000e+00> : vector<256xf32>
    %51 = vector.multi_reduction <add>, %50, %cst_40 [0] : vector<8x256xf32> to vector<256xf32>
    %52 = vector.shape_cast %51 : vector<256xf32> to vector<1x256xf32>
    %cst_41 = arith.constant 0.000000e+00 : f32
    %53 = vector.broadcast %cst_41 : f32 to vector<1x256xf32>
    %54 = arith.subf %53, %52 : vector<1x256xf32>
    %55 = math.exp %54 : vector<1x256xf32>
    %cst_42 = arith.constant 1.000000e+00 : f32
    %56 = vector.broadcast %cst_42 : f32 to vector<1x256xf32>
    %57 = arith.addf %56, %55 : vector<1x256xf32>
    %cst_43 = arith.constant 1.000000e+00 : f32
    %58 = vector.broadcast %cst_43 : f32 to vector<1x256xf32>
    %59 = arith.divf %58, %57 : vector<1x256xf32>
    %cst_44 = arith.constant 0.000000e+00 : f32
    %60 = vector.broadcast %cst_44 : f32 to vector<1x256xf32>
    %61 = arith.subf %60, %49 : vector<1x256xf32>
    %62 = math.exp %61 : vector<1x256xf32>
    %cst_45 = arith.constant 1.000000e+00 : f32
    %63 = vector.broadcast %cst_45 : f32 to vector<1x256xf32>
    %64 = arith.addf %63, %62 : vector<1x256xf32>
    %cst_46 = arith.constant 1.000000e+00 : f32
    %65 = vector.broadcast %cst_46 : f32 to vector<1x256xf32>
    %66 = arith.divf %65, %64 : vector<1x256xf32>
    %67 = arith.mulf %59, %66 : vector<1x256xf32>
    %68 = arith.subf %3, %1 : vector<8x256xf32>
    %69 = vector.broadcast %67 : vector<1x256xf32> to vector<8x256xf32>
    %70 = arith.mulf %69, %68 : vector<8x256xf32>
    %71 = arith.addf %1, %70 : vector<8x256xf32>
    %c0_47 = arith.constant 0 : index
    %c0_48 = arith.constant 0 : index
    %c0_49 = arith.constant 0 : index
    %72 = vector.load %arg7[%c0_47, %c0_48, %c0_49] : memref<1x8x256xf32, #tpu.memory_space<vmem>>, vector<1x8x256xf32>
    %73 = vector.shape_cast %72 : vector<1x8x256xf32> to vector<8x256xf32>
    %74 = vector.shape_cast %71 : vector<8x256xf32> to vector<1x8x256xf32>
    tpu.vector_store %arg7[%c0_47, %c0_48, %c0_49], %74 {strides = array<i32>} : memref<1x8x256xf32, #tpu.memory_space<vmem>>, vector<1x8x256xf32>,
    return
  }
  func.func @transform_0(%arg0: i32) -> (i32, i32, i32) {
    %c0_i32 = arith.constant 0 : i32
    %c0_i32_0 = arith.constant 0 : i32
    %c0_i32_1 = arith.constant 0 : i32
    return %arg0, %c0_i32, %c0_i32_0 : i32, i32, i32
  }
  func.func @transform_1(%arg0: i32) -> (i32, i32, i32) {
    %c0_i32 = arith.constant 0 : i32
    %c0_i32_0 = arith.constant 0 : i32
    %c0_i32_1 = arith.constant 0 : i32
    return %arg0, %c0_i32, %c0_i32_0 : i32, i32, i32
  }
  func.func @transform_2(%arg0: i32) -> (i32, i32) {
    %c0_i32 = arith.constant 0 : i32
    %c0_i32_0 = arith.constant 0 : i32
    %c0_i32_1 = arith.constant 0 : i32
    return %c0_i32, %c0_i32_0 : i32, i32
  }
  func.func @transform_3(%arg0: i32) -> (i32, i32, i32) {
    %c0_i32 = arith.constant 0 : i32
    %c0_i32_0 = arith.constant 0 : i32
    %c0_i32_1 = arith.constant 0 : i32
    %c0_i32_2 = arith.constant 0 : i32
    return %c0_i32, %c0_i32_0, %c0_i32_1 : i32, i32, i32
  }
  func.func @transform_4(%arg0: i32) -> (i32, i32) {
    %c0_i32 = arith.constant 0 : i32
    %c0_i32_0 = arith.constant 0 : i32
    %c0_i32_1 = arith.constant 0 : i32
    return %c0_i32, %c0_i32_0 : i32, i32
  }
  func.func @transform_5(%arg0: i32) -> (i32, i32) {
    %c0_i32 = arith.constant 0 : i32
    %c0_i32_0 = arith.constant 0 : i32
    %c0_i32_1 = arith.constant 0 : i32
    return %c0_i32, %c0_i32_0 : i32, i32
  }
  func.func @transform_6(%arg0: i32) -> (i32, i32, i32) {
    %c0_i32 = arith.constant 0 : i32
    %c0_i32_0 = arith.constant 0 : i32
    %c0_i32_1 = arith.constant 0 : i32
    return %arg0, %c0_i32, %c0_i32_0 : i32, i32, i32
  }
}

</mosaic_0001>

<llo_original>
// kernel: tpu_custom_call.1
$region0: #{tpu_custom_call.1}
  #allocation0 [shape = 'u32[]', space=smem, size = 0x4, offset = 0x4, fixed_abs, tag = 'smem constant byte address 0x4 - core index']
  #allocation1 [shape = 'u32[72,128]{1,0:T(1,128)}', space=vmem, size = 0x9000, scoped, tag = 'internal scratch']
  %s0 = inlined_call_operand.hbm [shape: f32[2,8,256], index: 0, kind: input, shape index: {}]
  %s1 = inlined_call_operand.hbm [shape: f32[2,8,256], index: 1, kind: input, shape index: {}]
  %s2 = inlined_call_operand.hbm [shape: f32[256,512], index: 2, kind: input, shape index: {}]
  %s3 = inlined_call_operand.hbm [shape: f32[9,256,256], index: 3, kind: input, shape index: {}]
  %s4 = inlined_call_operand.hbm [shape: f32[17,216], index: 4, kind: input, shape index: {}]
  %s5 = inlined_call_operand.vmem [shape: f32[17,1], index: 5, kind: input, shape index: {}]
  %s6 = inlined_call_operand.hbm [shape: f32[2,8,256], index: 6, kind: output, shape index: {}]
  %s7 = sld [smem:[#allocation0]]
  $region77: #{tpu_custom_call.1} parent=0
    _
  %s9 = ssub.s32 1, %s7
  %s10 = scalar_select 0, %s9, %s7
  $region1: #{tpu_custom_call.1} parent=0
    #allocation2 [shape = 'u8[16384]{0}', space=vmem, size = 0x4000, scoped, tag = 'input window, operand 0']
    #allocation3 [shape = 's32[2]{0}', space=sflag, size = 0x8, scoped, tag = 'scoped memory for tpu_custom_call.1']
    #allocation4 [shape = 's32[2]{0}', space=sflag, size = 0x8, scoped, tag = 'scoped memory for tpu_custom_call.1']
    #allocation5 [shape = 'u8[16384]{0}', space=vmem, size = 0x4000, scoped, tag = 'input window, operand 1']
    #allocation6 [shape = 's32[2]{0}', space=sflag, size = 0x8, scoped, tag = 'scoped memory for tpu_custom_call.1']
    #allocation7 [shape = 'u8[524288]{0}', space=vmem, size = 0x80000, scoped, tag = 'input window, operand 2, single buffered']
    #allocation8 [shape = 'u8[2359296]{0}', space=vmem, size = 0x240000, scoped, tag = 'input window, operand 3, single buffered']
    #allocation9 [shape = 's32[1]{0}', space=sflag, size = 0x4, scoped, tag = 'scoped memory for tpu_custom_call.1']
    #allocation10 [shape = 'u8[24576]{0}', space=vmem, size = 0x6000, scoped, tag = 'input window, operand 4, single buffered']
    #allocation11 [shape = 'u8[16384]{0}', space=vmem, size = 0x4000, scoped, tag = 'output window, operand 0']
    %11 = vsyncpa [#allocation3], 0
    %s12 = scalar_lea.sflag [#allocation3], 1
    %13 = vsyncpa %s12, 0
    %14 = vsyncpa [#allocation6], 0
    %s15 = scalar_lea.sflag [#allocation6], 1
    %16 = vsyncpa %s15, 0
    %17 = vsyncpa [#allocation9], 0
    %18 = vsyncpa [#allocation4], 0
    %s19 = scalar_lea.sflag [#allocation4], 1
    %20 = vsyncpa %s19, 0
    loop: start=0, step=1, limit=4
    $region2: #{tpu_custom_call.1} parent=1 // loop_pre_header
      _
    $region3: #{tpu_custom_call.1} parent=1 // loop_header
      %s22 = sphi 0, %s26
      %p23 = scmp.ge.s32.totalorder %s22, 4
      %s32 = sphi 0, %s34
      %s35 = sphi 0, %s32
      %s36 = sphi 0, %s35
      %s52 = sphi 0, %s36
      %s58 = sphi 0, %s60
      %s61 = sphi 0, %s58
      %s62 = sphi 0, %s61
      %s78 = sphi 0, %s62
      %s82 = sphi 0, %s82
      %s84 = sphi 0, %s82
      %s85 = sphi 0, %s84
      %s99 = sphi 0, %s85
      %s103 = sphi 0, %s103
      %s105 = sphi 0, %s103
      %s106 = sphi 0, %s105
      %s120 = sphi 0, %s106
      %s124 = sphi 0, %s124
      %s126 = sphi 0, %s124
      %s127 = sphi 0, %s126
      %s141 = sphi 0, %s127
      %s145 = sphi 0, %s145
      %s147 = sphi 0, %s145
      %s148 = sphi 0, %s147
      %s162 = sphi 0, %s148
      %s168 = sphi 0, %s170
      %s171 = sphi 0, %s168
      %s172 = sphi 0, %s171
      %s188 = sphi 0, %s172
    $region4: #{tpu_custom_call.1} parent=1 // loop_header_branch
      %25 = sbr.rel (%p23) target = $region8
    $region5: #{tpu_custom_call.1} parent=1 // loop_body
      %s27 = ssub.s32 %s22, 1
      %s28 = ssub.s32 %s22, 2
      %s29 = sadd.s32 %s22, 1
      %s30 = ssub.s32 %s22, %s29
      %p31 = scmp.eq.s32.totalorder %s30, 0
      %s33 = sadd.s32 %s32, 1
      %s34 = scalar_select %p31, %s32, %s33
      %p37 = pneg %p31
      %p38 = scmp.eq.s32.totalorder %s22, 1
      %p39 = por %p37, %p38
      %p40 = scmp.ne.s32.totalorder %s32, %s35
      %p41 = scmp.eq.s32.totalorder %s22, 0
      %p42 = por %p40, %p41
      %p43 = scmp.ne.s32.totalorder %s32, %s35
      %p44 = scmp.eq.s32.totalorder %s27, 1
      %p45 = por %p43, %p44
      %p46 = scmp.ne.s32.totalorder %s35, %s36
      %p47 = scmp.eq.s32.totalorder %s27, 0
      %p48 = por %p46, %p47
      %p49 = scmp.ne.s32.totalorder %s35, %s36
      %p50 = scmp.eq.s32.totalorder %s28, 1
      %p51 = por %p49, %p50
      %p53 = scmp.ne.s32.totalorder %s36, %s52
      %p54 = scmp.eq.s32.totalorder %s28, 0
      %p55 = por %p53, %p54
      %s56 = ssub.s32 %s22, %s29
      %p57 = scmp.eq.s32.totalorder %s56, 0
      %s59 = sadd.s32 %s58, 1
      %s60 = scalar_select %p57, %s58, %s59
      %p63 = pneg %p57
      %p64 = scmp.eq.s32.totalorder %s22, 1
      %p65 = por %p63, %p64
      %p66 = scmp.ne.s32.totalorder %s58, %s61
      %p67 = scmp.eq.s32.totalorder %s22, 0
      %p68 = por %p66, %p67
      %p69 = scmp.ne.s32.totalorder %s58, %s61
      %p70 = scmp.eq.s32.totalorder %s27, 1
      %p71 = por %p69, %p70
      %p72 = scmp.ne.s32.totalorder %s61, %s62
      %p73 = scmp.eq.s32.totalorder %s27, 0
      %p74 = por %p72, %p73
      %p75 = scmp.ne.s32.totalorder %s61, %s62
      %p76 = scmp.eq.s32.totalorder %s28, 1
      %p77 = por %p75, %p76
      %p79 = scmp.ne.s32.totalorder %s62, %s78
      %p80 = scmp.eq.s32.totalorder %s28, 0
      %p81 = por %p79, %p80
      %s83 = sadd.s32 %s82, 1
      %p86 = scmp.eq.s32.totalorder %s22, 1
      %p87 = scmp.ne.s32.totalorder %s82, %s84
      %p88 = scmp.eq.s32.totalorder %s22, 0
      %p89 = por %p87, %p88
      %p90 = scmp.ne.s32.totalorder %s82, %s84
      %p91 = scmp.eq.s32.totalorder %s27, 1
      %p92 = por %p90, %p91
      %p93 = scmp.ne.s32.totalorder %s84, %s85
      %p94 = scmp.eq.s32.totalorder %s27, 0
      %p95 = por %p93, %p94
      %p96 = scmp.ne.s32.totalorder %s84, %s85
      %p97 = scmp.eq.s32.totalorder %s28, 1
      %p98 = por %p96, %p97
      %p100 = scmp.ne.s32.totalorder %s85, %s99
      %p101 = scmp.eq.s32.totalorder %s28, 0
      %p102 = por %p100, %p101
      %s104 = sadd.s32 %s103, 1
      %p107 = scmp.eq.s32.totalorder %s22, 1
      %p108 = scmp.ne.s32.totalorder %s103, %s105
      %p109 = scmp.eq.s32.totalorder %s22, 0
      %p110 = por %p108, %p109
      %p111 = scmp.ne.s32.totalorder %s103, %s105
      %p112 = scmp.eq.s32.totalorder %s27, 1
      %p113 = por %p111, %p112
      %p114 = scmp.ne.s32.totalorder %s105, %s106
      %p115 = scmp.eq.s32.totalorder %s27, 0
      %p116 = por %p114, %p115
      %p117 = scmp.ne.s32.totalorder %s105, %s106
      %p118 = scmp.eq.s32.totalorder %s28, 1
      %p119 = por %p117, %p118
      %p121 = scmp.ne.s32.totalorder %s106, %s120
      %p122 = scmp.eq.s32.totalorder %s28, 0
      %p123 = por %p121, %p122
      %s125 = sadd.s32 %s124, 1
      %p128 = scmp.eq.s32.totalorder %s22, 1
      %p129 = scmp.ne.s32.totalorder %s124, %s126
      %p130 = scmp.eq.s32.totalorder %s22, 0
      %p131 = por %p129, %p130
      %p132 = scmp.ne.s32.totalorder %s124, %s126
      %p133 = scmp.eq.s32.totalorder %s27, 1
      %p134 = por %p132, %p133
      %p135 = scmp.ne.s32.totalorder %s126, %s127
      %p136 = scmp.eq.s32.totalorder %s27, 0
      %p137 = por %p135, %p136
      %p138 = scmp.ne.s32.totalorder %s126, %s127
      %p139 = scmp.eq.s32.totalorder %s28, 1
      %p140 = por %p138, %p139
      %p142 = scmp.ne.s32.totalorder %s127, %s141
      %p143 = scmp.eq.s32.totalorder %s28, 0
      %p144 = por %p142, %p143
      %s146 = sadd.s32 %s145, 1
      %p149 = scmp.eq.s32.totalorder %s22, 1
      %p150 = scmp.ne.s32.totalorder %s145, %s147
      %p151 = scmp.eq.s32.totalorder %s22, 0
      %p152 = por %p150, %p151
      %p153 = scmp.ne.s32.totalorder %s145, %s147
      %p154 = scmp.eq.s32.totalorder %s27, 1
      %p155 = por %p153, %p154
      %p156 = scmp.ne.s32.totalorder %s147, %s148
      %p157 = scmp.eq.s32.totalorder %s27, 0
      %p158 = por %p156, %p157
      %p159 = scmp.ne.s32.totalorder %s147, %s148
      %p160 = scmp.eq.s32.totalorder %s28, 1
      %p161 = por %p159, %p160
      %p163 = scmp.ne.s32.totalorder %s148, %s162
      %p164 = scmp.eq.s32.totalorder %s28, 0
      %p165 = por %p163, %p164
      %s166 = ssub.s32 %s22, %s29
      %p167 = scmp.eq.s32.totalorder %s166, 0
      %s169 = sadd.s32 %s168, 1
      %s170 = scalar_select %p167, %s168, %s169
      %p173 = pneg %p167
      %p174 = scmp.eq.s32.totalorder %s22, 1
      %p175 = por %p173, %p174
      %p176 = scmp.ne.s32.totalorder %s168, %s171
      %p177 = scmp.eq.s32.totalorder %s22, 0
      %p178 = por %p176, %p177
      %p179 = scmp.ne.s32.totalorder %s168, %s171
      %p180 = scmp.eq.s32.totalorder %s27, 1
      %p181 = por %p179, %p180
      %p182 = scmp.ne.s32.totalorder %s171, %s172
      %p183 = scmp.eq.s32.totalorder %s27, 0
      %p184 = por %p182, %p183
      %p185 = scmp.ne.s32.totalorder %s171, %s172
      %p186 = scmp.eq.s32.totalorder %s28, 1
      %p187 = por %p185, %p186
      %p189 = scmp.ne.s32.totalorder %s172, %s188
      %p190 = scmp.eq.s32.totalorder %s28, 0
      %p191 = por %p189, %p190
      %p192 = scmp.le.s32.totalorder 1, %s22
      %p193 = scmp.lt.s32.totalorder %s22, 3
      %p194 = pnand %p192, %p193
      %p195 = pneg %p194
      // Predicated region
      $region9: #{tpu_custom_call.1} parent=5 // pred_check
        _
      $region10: #{tpu_custom_call.1} parent=5 // pred_check_branch
        %197 = sbr.rel (%p194) target = $region12
      $region11: #{tpu_custom_call.1} parent=5 // pred_region
        %s198 = ssub.s32 %s22, 1
        // Predicated region
        $region13: #{tpu_custom_call.1} parent=11 // pred_check
          %p199 = pneg %p95
        $region14: #{tpu_custom_call.1} parent=11 // pred_check_branch
          %201 = sbr.rel (%p199) target = $region16
        $region15: #{tpu_custom_call.1} parent=11 // pred_region
          %203 = vsyncadd [#allocation6], 0
          %s204 = sshll.u32 %s2, 4
          %s205 = int_to_ptr.hbm [resolvable:$true] %s204
          %s206 = sshll.u32 [#allocation7], 4
          %s207 = int_to_ptr.vmem [resolvable:$true] %s206
          %212 = dma.hbm_to_vmem [thread:$0]  %s205, 16384, %s207, [#allocation6], 512, 512, 32
        $region16: #{tpu_custom_call.1} parent=11 // pred_fallthru
          _
        // Predicated region
        $region17: #{tpu_custom_call.1} parent=11 // pred_check
          %p213 = pneg %p116
        $region18: #{tpu_custom_call.1} parent=11 // pred_check_branch
          %215 = sbr.rel (%p213) target = $region20
        $region19: #{tpu_custom_call.1} parent=11 // pred_region
          %217 = vsyncadd [#allocation9], 0
          %s218 = sshll.u32 %s3, 4
          %s219 = int_to_ptr.hbm [resolvable:$true] %s218
          %s220 = sshll.u32 [#allocation8], 4
          %s221 = int_to_ptr.vmem [resolvable:$true] %s220
          %226 = dma.hbm_to_vmem [thread:$0]  %s219, 73728, %s221, [#allocation9], 256, 256, 16
        $region20: #{tpu_custom_call.1} parent=11 // pred_fallthru
          _
        // Predicated region
        $region21: #{tpu_custom_call.1} parent=11 // pred_check
          %p227 = pneg %p137
        $region22: #{tpu_custom_call.1} parent=11 // pred_check_branch
          %229 = sbr.rel (%p227) target = $region24
        $region23: #{tpu_custom_call.1} parent=11 // pred_region
          %231 = vsyncadd [#allocation9], 0
          %s232 = sshll.u32 %s4, 4
          %s233 = int_to_ptr.hbm [resolvable:$true] %s232
          %s234 = sshll.u32 [#allocation10], 4
          %s235 = int_to_ptr.vmem [resolvable:$true] %s234
          %240 = dma.hbm_to_vmem [thread:$0]  %s233, 768, %s235, [#allocation9], 256, 256, 16
        $region24: #{tpu_custom_call.1} parent=11 // pred_fallthru
          _
        // Predicated region
        $region25: #{tpu_custom_call.1} parent=11 // pred_check
          %p241 = pneg %p158
        $region26: #{tpu_custom_call.1} parent=11 // pred_check_branch
          %243 = sbr.rel (%p241) target = $region28
        $region27: #{tpu_custom_call.1} parent=11 // pred_region
          _
        $region28: #{tpu_custom_call.1} parent=11 // pred_fallthru
          _
      $region12: #{tpu_custom_call.1} parent=5 // pred_fallthru
        _
      %p244 = scmp.lt.s32.totalorder %s22, 2
      // Predicated region
      $region29: #{tpu_custom_call.1} parent=5 // pred_check
        %p245 = pneg %p244
      $region30: #{tpu_custom_call.1} parent=5 // pred_check_branch
        %247 = sbr.rel (%p245) target = $region32
      $region31: #{tpu_custom_call.1} parent=5 // pred_region
        // Predicated region
        $region33: #{tpu_custom_call.1} parent=31 // pred_check
          %p248 = pneg %p42
        $region34: #{tpu_custom_call.1} parent=31 // pred_check_branch
          %250 = sbr.rel (%p248) target = $region36
        $region35: #{tpu_custom_call.1} parent=31 // pred_region
          %s251 = sand.u32 %s32, 1
          %s252 = scalar_lea.sflag [#allocation3], %s251
          %s253 = sand.u32 %s32, 1
          %s254 = smul.addr %s253, 16
          %s255 = scalar_lea.vmem [#allocation2], %s254
          %257 = vsyncadd %s252, 0
          %s258 = smul.addr %s22, 2
          %s259 = smul.addr %s258, 8
          %s260 = scalar_lea.hbm %s0, %s259
          %s262 = sshll.u32 %s260, 4
          %s263 = int_to_ptr.hbm [resolvable:$true] %s262
          %s264 = sshll.u32 %s255, 4
          %s265 = int_to_ptr.vmem [resolvable:$true] %s264
          %267 = dma.hbm_to_vmem [thread:$0]  %s263, 256, %s265, %s252
        $region36: #{tpu_custom_call.1} parent=31 // pred_fallthru
          _
        // Predicated region
        $region37: #{tpu_custom_call.1} parent=31 // pred_check
          %p268 = pneg %p68
        $region38: #{tpu_custom_call.1} parent=31 // pred_check_branch
          %270 = sbr.rel (%p268) target = $region40
        $region39: #{tpu_custom_call.1} parent=31 // pred_region
          %s271 = sand.u32 %s22, 1
          %s272 = scalar_lea.sflag [#allocation6], %s271
          %s273 = sand.u32 %s58, 1
          %s274 = smul.addr %s273, 16
          %s275 = scalar_lea.vmem [#allocation5], %s274
          %277 = vsyncadd %s272, 0
          %s278 = smul.addr %s22, 2
          %s279 = smul.addr %s278, 8
          %s280 = scalar_lea.hbm %s1, %s279
          %s282 = sshll.u32 %s280, 4
          %s283 = int_to_ptr.hbm [resolvable:$true] %s282
          %s284 = sshll.u32 %s275, 4
          %s285 = int_to_ptr.vmem [resolvable:$true] %s284
          %287 = dma.hbm_to_vmem [thread:$0]  %s283, 256, %s285, %s272
        $region40: #{tpu_custom_call.1} parent=31 // pred_fallthru
          _
      $region32: #{tpu_custom_call.1} parent=5 // pred_fallthru
        _
      %p288 = scmp.le.s32.totalorder 1, %s22
      %p289 = scmp.lt.s32.totalorder %s22, 3
      %p290 = pnand %p288, %p289
      %p291 = pneg %p290
      // Predicated region
      $region41: #{tpu_custom_call.1} parent=5 // pred_check
        _
      $region42: #{tpu_custom_call.1} parent=5 // pred_check_branch
        %293 = sbr.rel (%p290) target = $region44
      $region43: #{tpu_custom_call.1} parent=5 // pred_region
        %s294 = ssub.s32 %s22, 1
        %s295 = sand.u32 %s35, 1
        %s296 = scalar_lea.sflag [#allocation3], %s295
        %s297 = sand.u32 %s35, 1
        %s298 = smul.addr %s297, 16
        %s299 = scalar_lea.vmem [#allocation2], %s298
        // Predicated region
        $region45: #{tpu_custom_call.1} parent=43 // pred_check
          %p300 = pneg %p48
        $region46: #{tpu_custom_call.1} parent=43 // pred_check_branch
          %302 = sbr.rel (%p300) target = $region48
        $region47: #{tpu_custom_call.1} parent=43 // pred_region
          %304 = dma.done %s296, 256
        $region48: #{tpu_custom_call.1} parent=43 // pred_fallthru
          _
        %s305 = sand.u32 %s27, 1
        %s306 = scalar_lea.sflag [#allocation6], %s305
        %s307 = sand.u32 %s61, 1
        %s308 = smul.addr %s307, 16
        %s309 = scalar_lea.vmem [#allocation5], %s308
        // Predicated region
        $region49: #{tpu_custom_call.1} parent=43 // pred_check
          %p310 = pneg %p74
        $region50: #{tpu_custom_call.1} parent=43 // pred_check_branch
          %312 = sbr.rel (%p310) target = $region52
        $region51: #{tpu_custom_call.1} parent=43 // pred_region
          %314 = dma.done %s306, 256
        $region52: #{tpu_custom_call.1} parent=43 // pred_fallthru
          _
        // Predicated region
        $region53: #{tpu_custom_call.1} parent=43 // pred_check
          %p315 = pneg %p95
        $region54: #{tpu_custom_call.1} parent=43 // pred_check_branch
          %317 = sbr.rel (%p315) target = $region56
        $region55: #{tpu_custom_call.1} parent=43 // pred_region
          %319 = dma.done [#allocation6], 16384
        $region56: #{tpu_custom_call.1} parent=43 // pred_fallthru
          _
        // Predicated region
        $region57: #{tpu_custom_call.1} parent=43 // pred_check
          %p320 = pneg %p116
        $region58: #{tpu_custom_call.1} parent=43 // pred_check_branch
          %322 = sbr.rel (%p320) target = $region60
        $region59: #{tpu_custom_call.1} parent=43 // pred_region
          %324 = dma.done [#allocation9], 73728
        $region60: #{tpu_custom_call.1} parent=43 // pred_fallthru
          _
        // Predicated region
        $region61: #{tpu_custom_call.1} parent=43 // pred_check
          %p325 = pneg %p137
        $region62: #{tpu_custom_call.1} parent=43 // pred_check_branch
          %327 = sbr.rel (%p325) target = $region64
        $region63: #{tpu_custom_call.1} parent=43 // pred_region
          %329 = dma.done [#allocation9], 768
        $region64: #{tpu_custom_call.1} parent=43 // pred_fallthru
          _
        %s330 = sand.u32 %s35, 1
        %s331 = scalar_lea.sflag [#allocation3], %s330
        %s332 = sand.u32 %s35, 1
        %s333 = smul.addr %s332, 16
        %s334 = scalar_lea.vmem [#allocation2], %s333
        %p335 = pneg %p48
        %p336 = pneg %p45
        %s337 = sand.u32 %s27, 1
        %s338 = scalar_lea.sflag [#allocation6], %s337
        %s339 = sand.u32 %s61, 1
        %s340 = smul.addr %s339, 16
        %s341 = scalar_lea.vmem [#allocation5], %s340
        %p342 = pneg %p74
        %p343 = pneg %p71
        %p344 = pneg %p95
        %p345 = pneg %p92
        %p346 = pneg %p116
        %p347 = pneg %p113
        %p348 = pneg %p137
        %p349 = pneg %p134
        %p350 = pneg %p158
        %p351 = pneg %p155
        %p352 = pneg %p184
        %p353 = pneg %p181
        %s354 = sand.u32 %s171, 1
        %s355 = scalar_lea.sflag [#allocation4], %s354
        %s356 = sand.u32 %s171, 1
        %s357 = smul.addr %s356, 16
        %s358 = scalar_lea.vmem [#allocation11], %s357
        %v359 = vld [vmem:[%s299] sm:$0xff]
        %v360 = vld [vmem:[%s299 + $0x8] sm:$0xff]
        %v361 = vld [vmem:[%s309] sm:$0xff]
        %v362 = vld [vmem:[%s309 + $0x8] sm:$0xff]
        %v363 = vsub.f32 %v359, %v361
        %v364 = vsub.f32 %v360, %v362
        %v365 = vld [vmem:[#allocation7] sm:$0xff]
        %v366 = vld [vmem:[#allocation7 + $0x8] sm:$0xff]
        %v367 = vld [vmem:[#allocation7 + $0x10] sm:$0xff]
        %v368 = vld [vmem:[#allocation7 + $0x18] sm:$0xff]
        %v369 = vld [vmem:[#allocation7 + $0x20] sm:$0xff]
        %v370 = vld [vmem:[#allocation7 + $0x28] sm:$0xff]
        %v371 = vld [vmem:[#allocation7 + $0x30] sm:$0xff]
        %v372 = vld [vmem:[#allocation7 + $0x38] sm:$0xff]
        %v373 = vld [vmem:[#allocation7 + $0x40] sm:$0xff]
        %v374 = vld [vmem:[#allocation7 + $0x48] sm:$0xff]
        %v375 = vld [vmem:[#allocation7 + $0x50] sm:$0xff]
        %v376 = vld [vmem:[#allocation7 + $0x58] sm:$0xff]
        %v377 = vld [vmem:[#allocation7 + $0x60] sm:$0xff]
        %v378 = vld [vmem:[#allocation7 + $0x68] sm:$0xff]
        %v379 = vld [vmem:[#allocation7 + $0x70] sm:$0xff]
        %v380 = vld [vmem:[#allocation7 + $0x78] sm:$0xff]
        %v381 = vld [vmem:[#allocation7 + $0x80] sm:$0xff]
        %v382 = vld [vmem:[#allocation7 + $0x88] sm:$0xff]
        %v383 = vld [vmem:[#allocation7 + $0x90] sm:$0xff]
        %v384 = vld [vmem:[#allocation7 + $0x98] sm:$0xff]
        %v385 = vld [vmem:[#allocation7 + $0xa0] sm:$0xff]
        %v386 = vld [vmem:[#allocation7 + $0xa8] sm:$0xff]
        %v387 = vld [vmem:[#allocation7 + $0xb0] sm:$0xff]
        %v388 = vld [vmem:[#allocation7 + $0xb8] sm:$0xff]
        %v389 = vld [vmem:[#allocation7 + $0xc0] sm:$0xff]
        %v390 = vld [vmem:[#allocation7 + $0xc8] sm:$0xff]
        %v391 = vld [vmem:[#allocation7 + $0xd0] sm:$0xff]
        %v392 = vld [vmem:[#allocation7 + $0xd8] sm:$0xff]
        %v393 = vld [vmem:[#allocation7 + $0xe0] sm:$0xff]
        %v394 = vld [vmem:[#allocation7 + $0xe8] sm:$0xff]
        %v395 = vld [vmem:[#allocation7 + $0xf0] sm:$0xff]
        %v396 = vld [vmem:[#allocation7 + $0xf8] sm:$0xff]
        %v397 = vld [vmem:[#allocation7 + $0x100] sm:$0xff]
        %v398 = vld [vmem:[#allocation7 + $0x108] sm:$0xff]
        %v399 = vld [vmem:[#allocation7 + $0x110] sm:$0xff]
        %v400 = vld [vmem:[#allocation7 + $0x118] sm:$0xff]
        %v401 = vld [vmem:[#allocation7 + $0x120] sm:$0xff]
        %v402 = vld [vmem:[#allocation7 + $0x128] sm:$0xff]
        %v403 = vld [vmem:[#allocation7 + $0x130] sm:$0xff]
        %v404 = vld [vmem:[#allocation7 + $0x138] sm:$0xff]
        %v405 = vld [vmem:[#allocation7 + $0x140] sm:$0xff]
        %v406 = vld [vmem:[#allocation7 + $0x148] sm:$0xff]
        %v407 = vld [vmem:[#allocation7 + $0x150] sm:$0xff]
        %v408 = vld [vmem:[#allocation7 + $0x158] sm:$0xff]
        %v409 = vld [vmem:[#allocation7 + $0x160] sm:$0xff]
        %v410 = vld [vmem:[#allocation7 + $0x168] sm:$0xff]
        %v411 = vld [vmem:[#allocation7 + $0x170] sm:$0xff]
        %v412 = vld [vmem:[#allocation7 + $0x178] sm:$0xff]
        %v413 = vld [vmem:[#allocation7 + $0x180] sm:$0xff]
        %v414 = vld [vmem:[#allocation7 + $0x188] sm:$0xff]
        %v415 = vld [vmem:[#allocation7 + $0x190] sm:$0xff]
        %v416 = vld [vmem:[#allocation7 + $0x198] sm:$0xff]
        %v417 = vld [vmem:[#allocation7 + $0x1a0] sm:$0xff]
        %v418 = vld [vmem:[#allocation7 + $0x1a8] sm:$0xff]
        %v419 = vld [vmem:[#allocation7 + $0x1b0] sm:$0xff]
        %v420 = vld [vmem:[#allocation7 + $0x1b8] sm:$0xff]
        %v421 = vld [vmem:[#allocation7 + $0x1c0] sm:$0xff]
        %v422 = vld [vmem:[#allocation7 + $0x1c8] sm:$0xff]
        %v423 = vld [vmem:[#allocation7 + $0x1d0] sm:$0xff]
        %v424 = vld [vmem:[#allocation7 + $0x1d8] sm:$0xff]
        %v425 = vld [vmem:[#allocation7 + $0x1e0] sm:$0xff]
        %v426 = vld [vmem:[#allocation7 + $0x1e8] sm:$0xff]
        %v427 = vld [vmem:[#allocation7 + $0x1f0] sm:$0xff]
        %v428 = vld [vmem:[#allocation7 + $0x1f8] sm:$0xff]
        %v429 = vld [vmem:[#allocation7 + $0x200] sm:$0xff]
        %v430 = vld [vmem:[#allocation7 + $0x208] sm:$0xff]
        %v431 = vld [vmem:[#allocation7 + $0x210] sm:$0xff]
        %v432 = vld [vmem:[#allocation7 + $0x218] sm:$0xff]
        %v433 = vld [vmem:[#allocation7 + $0x220] sm:$0xff]
        %v434 = vld [vmem:[#allocation7 + $0x228] sm:$0xff]
        %v435 = vld [vmem:[#allocation7 + $0x230] sm:$0xff]
        %v436 = vld [vmem:[#allocation7 + $0x238] sm:$0xff]
        %v437 = vld [vmem:[#allocation7 + $0x240] sm:$0xff]
        %v438 = vld [vmem:[#allocation7 + $0x248] sm:$0xff]
        %v439 = vld [vmem:[#allocation7 + $0x250] sm:$0xff]
        %v440 = vld [vmem:[#allocation7 + $0x258] sm:$0xff]
        %v441 = vld [vmem:[#allocation7 + $0x260] sm:$0xff]
        %v442 = vld [vmem:[#allocation7 + $0x268] sm:$0xff]
        %v443 = vld [vmem:[#allocation7 + $0x270] sm:$0xff]
        %v444 = vld [vmem:[#allocation7 + $0x278] sm:$0xff]
        %v445 = vld [vmem:[#allocation7 + $0x280] sm:$0xff]
        %v446 = vld [vmem:[#allocation7 + $0x288] sm:$0xff]
        %v447 = vld [vmem:[#allocation7 + $0x290] sm:$0xff]
        %v448 = vld [vmem:[#allocation7 + $0x298] sm:$0xff]
        %v449 = vld [vmem:[#allocation7 + $0x2a0] sm:$0xff]
        %v450 = vld [vmem:[#allocation7 + $0x2a8] sm:$0xff]
        %v451 = vld [vmem:[#allocation7 + $0x2b0] sm:$0xff]
        %v452 = vld [vmem:[#allocation7 + $0x2b8] sm:$0xff]
        %v453 = vld [vmem:[#allocation7 + $0x2c0] sm:$0xff]
        %v454 = vld [vmem:[#allocation7 + $0x2c8] sm:$0xff]
        %v455 = vld [vmem:[#allocation7 + $0x2d0] sm:$0xff]
        %v456 = vld [vmem:[#allocation7 + $0x2d8] sm:$0xff]
        %v457 = vld [vmem:[#allocation7 + $0x2e0] sm:$0xff]
        %v458 = vld [vmem:[#allocation7 + $0x2e8] sm:$0xff]
        %v459 = vld [vmem:[#allocation7 + $0x2f0] sm:$0xff]
        %v460 = vld [vmem:[#allocation7 + $0x2f8] sm:$0xff]
        %v461 = vld [vmem:[#allocation7 + $0x300] sm:$0xff]
        %v462 = vld [vmem:[#allocation7 + $0x308] sm:$0xff]
        %v463 = vld [vmem:[#allocation7 + $0x310] sm:$0xff]
        %v464 = vld [vmem:[#allocation7 + $0x318] sm:$0xff]
        %v465 = vld [vmem:[#allocation7 + $0x320] sm:$0xff]
        %v466 = vld [vmem:[#allocation7 + $0x328] sm:$0xff]
        %v467 = vld [vmem:[#allocation7 + $0x330] sm:$0xff]
        %v468 = vld [vmem:[#allocation7 + $0x338] sm:$0xff]
        %v469 = vld [vmem:[#allocation7 + $0x340] sm:$0xff]
        %v470 = vld [vmem:[#allocation7 + $0x348] sm:$0xff]
        %v471 = vld [vmem:[#allocation7 + $0x350] sm:$0xff]
        %v472 = vld [vmem:[#allocation7 + $0x358] sm:$0xff]
        %v473 = vld [vmem:[#allocation7 + $0x360] sm:$0xff]
        %v474 = vld [vmem:[#allocation7 + $0x368] sm:$0xff]
        %v475 = vld [vmem:[#allocation7 + $0x370] sm:$0xff]
        %v476 = vld [vmem:[#allocation7 + $0x378] sm:$0xff]
        %v477 = vld [vmem:[#allocation7 + $0x380] sm:$0xff]
        %v478 = vld [vmem:[#allocation7 + $0x388] sm:$0xff]
        %v479 = vld [vmem:[#allocation7 + $0x390] sm:$0xff]
        %v480 = vld [vmem:[#allocation7 + $0x398] sm:$0xff]
        %v481 = vld [vmem:[#allocation7 + $0x3a0] sm:$0xff]
        %v482 = vld [vmem:[#allocation7 + $0x3a8] sm:$0xff]
        %v483 = vld [vmem:[#allocation7 + $0x3b0] sm:$0xff]
        %v484 = vld [vmem:[#allocation7 + $0x3b8] sm:$0xff]
        %v485 = vld [vmem:[#allocation7 + $0x3c0] sm:$0xff]
        %v486 = vld [vmem:[#allocation7 + $0x3c8] sm:$0xff]
        %v487 = vld [vmem:[#allocation7 + $0x3d0] sm:$0xff]
        %v488 = vld [vmem:[#allocation7 + $0x3d8] sm:$0xff]
        %v489 = vld [vmem:[#allocation7 + $0x3e0] sm:$0xff]
        %v490 = vld [vmem:[#allocation7 + $0x3e8] sm:$0xff]
        %v491 = vld [vmem:[#allocation7 + $0x3f0] sm:$0xff]
        %v492 = vld [vmem:[#allocation7 + $0x3f8] sm:$0xff]
        %493 = vmatpush.msra.mxu0 %v425
        %494 = vmatpush.msra.mxu0 %v421
        %495 = vmatpush.msra.mxu0 %v417
        %496 = vmatpush.msra.mxu0 %v413
        %497 = vmatpush.msra.mxu0 %v409
        %498 = vmatpush.msra.mxu0 %v405
        %499 = vmatpush.msra.mxu0 %v401
        %500 = vmatpush.msra.mxu0 %v397
        %501 = vmatpush.msra.mxu0 %v393
        %502 = vmatpush.msra.mxu0 %v389
        %503 = vmatpush.msra.mxu0 %v385
        %504 = vmatpush.msra.mxu0 %v381
        %505 = vmatpush.msra.mxu0 %v377
        %506 = vmatpush.msra.mxu0 %v373
        %507 = vmatpush.msra.mxu0 %v369
        %508 = vmatpush.msra.mxu0 %v365
        %509 = vmatmul.f32.gmra.mxu0 %v363
        %v510 = vpop.f32.mrf.mxu0
        %v511 = vadd.f32 0.0, %v510
        %512 = vdwg.mxu0
        %513 = vmatpush.msra.mxu0 %v489
        %514 = vmatpush.msra.mxu0 %v485
        %515 = vmatpush.msra.mxu0 %v481
        %516 = vmatpush.msra.mxu0 %v477
        %517 = vmatpush.msra.mxu0 %v473
        %518 = vmatpush.msra.mxu0 %v469
        %519 = vmatpush.msra.mxu0 %v465
        %520 = vmatpush.msra.mxu0 %v461
        %521 = vmatpush.msra.mxu0 %v457
        %522 = vmatpush.msra.mxu0 %v453
        %523 = vmatpush.msra.mxu0 %v449
        %524 = vmatpush.msra.mxu0 %v445
        %525 = vmatpush.msra.mxu0 %v441
        %526 = vmatpush.msra.mxu0 %v437
        %527 = vmatpush.msra.mxu0 %v433
        %528 = vmatpush.msra.mxu0 %v429
        %529 = vmatmul.f32.gmra.mxu0 %v364
        %v530 = vpop.f32.mrf.mxu0
        %v531 = vadd.f32 %v511, %v530
        %532 = vdwg.mxu0
        %533 = vmatpush.msra.mxu0 %v426
        %534 = vmatpush.msra.mxu0 %v422
        %535 = vmatpush.msra.mxu0 %v418
        %536 = vmatpush.msra.mxu0 %v414
        %537 = vmatpush.msra.mxu0 %v410
        %538 = vmatpush.msra.mxu0 %v406
        %539 = vmatpush.msra.mxu0 %v402
        %540 = vmatpush.msra.mxu0 %v398
        %541 = vmatpush.msra.mxu0 %v394
        %542 = vmatpush.msra.mxu0 %v390
        %543 = vmatpush.msra.mxu0 %v386
        %544 = vmatpush.msra.mxu0 %v382
        %545 = vmatpush.msra.mxu0 %v378
        %546 = vmatpush.msra.mxu0 %v374
        %547 = vmatpush.msra.mxu0 %v370
        %548 = vmatpush.msra.mxu0 %v366
        %549 = vmatmul.f32.gmra.mxu0 %v363
        %v550 = vpop.f32.mrf.mxu0
        %v551 = vadd.f32 0.0, %v550
        %552 = vdwg.mxu0
        %553 = vmatpush.msra.mxu0 %v490
        %554 = vmatpush.msra.mxu0 %v486
        %555 = vmatpush.msra.mxu0 %v482
        %556 = vmatpush.msra.mxu0 %v478
        %557 = vmatpush.msra.mxu0 %v474
        %558 = vmatpush.msra.mxu0 %v470
        %559 = vmatpush.msra.mxu0 %v466
        %560 = vmatpush.msra.mxu0 %v462
        %561 = vmatpush.msra.mxu0 %v458
        %562 = vmatpush.msra.mxu0 %v454
        %563 = vmatpush.msra.mxu0 %v450
        %564 = vmatpush.msra.mxu0 %v446
        %565 = vmatpush.msra.mxu0 %v442
        %566 = vmatpush.msra.mxu0 %v438
        %567 = vmatpush.msra.mxu0 %v434
        %568 = vmatpush.msra.mxu0 %v430
        %569 = vmatmul.f32.gmra.mxu0 %v364
        %v570 = vpop.f32.mrf.mxu0
        %v571 = vadd.f32 %v551, %v570
        %572 = vdwg.mxu0
        %573 = vmatpush.msra.mxu0 %v427
        %574 = vmatpush.msra.mxu0 %v423
        %575 = vmatpush.msra.mxu0 %v419
        %576 = vmatpush.msra.mxu0 %v415
        %577 = vmatpush.msra.mxu0 %v411
        %578 = vmatpush.msra.mxu0 %v407
        %579 = vmatpush.msra.mxu0 %v403
        %580 = vmatpush.msra.mxu0 %v399
        %581 = vmatpush.msra.mxu0 %v395
        %582 = vmatpush.msra.mxu0 %v391
        %583 = vmatpush.msra.mxu0 %v387
        %584 = vmatpush.msra.mxu0 %v383
        %585 = vmatpush.msra.mxu0 %v379
        %586 = vmatpush.msra.mxu0 %v375
        %587 = vmatpush.msra.mxu0 %v371
        %588 = vmatpush.msra.mxu0 %v367
        %589 = vmatmul.f32.gmra.mxu0 %v363
        %v590 = vpop.f32.mrf.mxu0
        %v591 = vadd.f32 0.0, %v590
        %592 = vdwg.mxu0
        %593 = vmatpush.msra.mxu0 %v491
        %594 = vmatpush.msra.mxu0 %v487
        %595 = vmatpush.msra.mxu0 %v483
        %596 = vmatpush.msra.mxu0 %v479
        %597 = vmatpush.msra.mxu0 %v475
        %598 = vmatpush.msra.mxu0 %v471
        %599 = vmatpush.msra.mxu0 %v467
        %600 = vmatpush.msra.mxu0 %v463
        %601 = vmatpush.msra.mxu0 %v459
        %602 = vmatpush.msra.mxu0 %v455
        %603 = vmatpush.msra.mxu0 %v451
        %604 = vmatpush.msra.mxu0 %v447
        %605 = vmatpush.msra.mxu0 %v443
        %606 = vmatpush.msra.mxu0 %v439
        %607 = vmatpush.msra.mxu0 %v435
        %608 = vmatpush.msra.mxu0 %v431
        %609 = vmatmul.f32.gmra.mxu0 %v364
        %v610 = vpop.f32.mrf.mxu0
        %v611 = vadd.f32 %v591, %v610
        %612 = vdwg.mxu0
        %613 = vmatpush.msra.mxu0 %v428
        %614 = vmatpush.msra.mxu0 %v424
        %615 = vmatpush.msra.mxu0 %v420
        %616 = vmatpush.msra.mxu0 %v416
        %617 = vmatpush.msra.mxu0 %v412
        %618 = vmatpush.msra.mxu0 %v408
        %619 = vmatpush.msra.mxu0 %v404
        %620 = vmatpush.msra.mxu0 %v400
        %621 = vmatpush.msra.mxu0 %v396
        %622 = vmatpush.msra.mxu0 %v392
        %623 = vmatpush.msra.mxu0 %v388
        %624 = vmatpush.msra.mxu0 %v384
        %625 = vmatpush.msra.mxu0 %v380
        %626 = vmatpush.msra.mxu0 %v376
        %627 = vmatpush.msra.mxu0 %v372
        %628 = vmatpush.msra.mxu0 %v368
        %629 = vmatmul.f32.gmra.mxu0 %v363
        %v630 = vpop.f32.mrf.mxu0
        %v631 = vadd.f32 0.0, %v630
        %632 = vdwg.mxu0
        %633 = vmatpush.msra.mxu0 %v492
        %634 = vmatpush.msra.mxu0 %v488
        %635 = vmatpush.msra.mxu0 %v484
        %636 = vmatpush.msra.mxu0 %v480
        %637 = vmatpush.msra.mxu0 %v476
        %638 = vmatpush.msra.mxu0 %v472
        %639 = vmatpush.msra.mxu0 %v468
        %640 = vmatpush.msra.mxu0 %v464
        %641 = vmatpush.msra.mxu0 %v460
        %642 = vmatpush.msra.mxu0 %v456
        %643 = vmatpush.msra.mxu0 %v452
        %644 = vmatpush.msra.mxu0 %v448
        %645 = vmatpush.msra.mxu0 %v444
        %646 = vmatpush.msra.mxu0 %v440
        %647 = vmatpush.msra.mxu0 %v436
        %648 = vmatpush.msra.mxu0 %v432
        %649 = vmatmul.f32.gmra.mxu0 %v364
        %v650 = vpop.f32.mrf.mxu0
        %v651 = vadd.f32 %v631, %v650
        %652 = vdwg.mxu0
        %v653 = vmul.f32 %v531, %v531
        %v654 = vmul.f32 %v571, %v571
        %v655 = vmul.f32 %v611, %v611
        %v656 = vmul.f32 %v651, %v651
        %v657 = vadd.f32 %v653, %v655
        %v658 = vadd.f32 %v654, %v656
        %v659 = vrsqrt.pop %v657
        %v660 = vmul.f32 %v659, %v657
        %v661 = vmul.f32 %v660, %v659
        %v662 = vmul.f32 0.5, %v661
        %v663 = vsub.f32 1.5, %v662
        %v664 = vmul.f32 %v659, %v663
        %v665 = vmul.f32 %v657, %v664
        %vm666 = vcmp.eq.f32.partialorder %v657, inf
        %v667 = vsel %vm666, %v657, %v665
        %vm668 = vcmp.eq.f32.partialorder %v657, 0.0
        %v669 = vand.u32 %v657, 2147483648
        %v670 = vsel %vm668, %v669, %v667
        %v671 = vrsqrt.pop %v658
        %v672 = vmul.f32 %v671, %v658
        %v673 = vmul.f32 %v672, %v671
        %v674 = vmul.f32 0.5, %v673
        %v675 = vsub.f32 1.5, %v674
        %v676 = vmul.f32 %v671, %v675
        %v677 = vmul.f32 %v658, %v676
        %vm678 = vcmp.eq.f32.partialorder %v658, inf
        %v679 = vsel %vm678, %v658, %v677
        %vm680 = vcmp.eq.f32.partialorder %v658, 0.0
        %v681 = vand.u32 %v658, 2147483648
        %v682 = vsel %vm680, %v681, %v679
        %v683 = vld [vmem:[#allocation8] sm:$0xff]
        %v684 = vld [vmem:[#allocation8 + $0x8] sm:$0xff]
        %v685 = vld [vmem:[#allocation8 + $0x10] sm:$0xff]
        %v686 = vld [vmem:[#allocation8 + $0x18] sm:$0xff]
        %v687 = vld [vmem:[#allocation8 + $0x20] sm:$0xff]
        %v688 = vld [vmem:[#allocation8 + $0x28] sm:$0xff]
        %v689 = vld [vmem:[#allocation8 + $0x30] sm:$0xff]
        %v690 = vld [vmem:[#allocation8 + $0x38] sm:$0xff]
        %v691 = vld [vmem:[#allocation8 + $0x40] sm:$0xff]
        %v692 = vld [vmem:[#allocation8 + $0x48] sm:$0xff]
        %v693 = vld [vmem:[#allocation8 + $0x50] sm:$0xff]
        %v694 = vld [vmem:[#allocation8 + $0x58] sm:$0xff]
        %v695 = vld [vmem:[#allocation8 + $0x60] sm:$0xff]
        %v696 = vld [vmem:[#allocation8 + $0x68] sm:$0xff]
        %v697 = vld [vmem:[#allocation8 + $0x70] sm:$0xff]
        %v698 = vld [vmem:[#allocation8 + $0x78] sm:$0xff]
        %v699 = vld [vmem:[#allocation8 + $0x80] sm:$0xff]
        %v700 = vld [vmem:[#allocation8 + $0x88] sm:$0xff]
        %v701 = vld [vmem:[#allocation8 + $0x90] sm:$0xff]
        %v702 = vld [vmem:[#allocation8 + $0x98] sm:$0xff]
        %v703 = vld [vmem:[#allocation8 + $0xa0] sm:$0xff]
        %v704 = vld [vmem:[#allocation8 + $0xa8] sm:$0xff]
        %v705 = vld [vmem:[#allocation8 + $0xb0] sm:$0xff]
        %v706 = vld [vmem:[#allocation8 + $0xb8] sm:$0xff]
        %v707 = vld [vmem:[#allocation8 + $0xc0] sm:$0xff]
        %v708 = vld [vmem:[#allocation8 + $0xc8] sm:$0xff]
        %v709 = vld [vmem:[#allocation8 + $0xd0] sm:$0xff]
        %v710 = vld [vmem:[#allocation8 + $0xd8] sm:$0xff]
        %v711 = vld [vmem:[#allocation8 + $0xe0] sm:$0xff]
        %v712 = vld [vmem:[#allocation8 + $0xe8] sm:$0xff]
        %v713 = vld [vmem:[#allocation8 + $0xf0] sm:$0xff]
        %v714 = vld [vmem:[#allocation8 + $0xf8] sm:$0xff]
        %v715 = vld [vmem:[#allocation8 + $0x100] sm:$0xff]
        %v716 = vld [vmem:[#allocation8 + $0x108] sm:$0xff]
        %v717 = vld [vmem:[#allocation8 + $0x110] sm:$0xff]
        %v718 = vld [vmem:[#allocation8 + $0x118] sm:$0xff]
        %v719 = vld [vmem:[#allocation8 + $0x120] sm:$0xff]
        %v720 = vld [vmem:[#allocation8 + $0x128] sm:$0xff]
        %v721 = vld [vmem:[#allocation8 + $0x130] sm:$0xff]
        %v722 = vld [vmem:[#allocation8 + $0x138] sm:$0xff]
        %v723 = vld [vmem:[#allocation8 + $0x140] sm:$0xff]
        %v724 = vld [vmem:[#allocation8 + $0x148] sm:$0xff]
        %v725 = vld [vmem:[#allocation8 + $0x150] sm:$0xff]
        %v726 = vld [vmem:[#allocation8 + $0x158] sm:$0xff]
        %v727 = vld [vmem:[#allocation8 + $0x160] sm:$0xff]
        %v728 = vld [vmem:[#allocation8 + $0x168] sm:$0xff]
        %v729 = vld [vmem:[#allocation8 + $0x170] sm:$0xff]
        %v730 = vld [vmem:[#allocation8 + $0x178] sm:$0xff]
        %v731 = vld [vmem:[#allocation8 + $0x180] sm:$0xff]
        %v732 = vld [vmem:[#allocation8 + $0x188] sm:$0xff]
        %v733 = vld [vmem:[#allocation8 + $0x190] sm:$0xff]
        %v734 = vld [vmem:[#allocation8 + $0x198] sm:$0xff]
        %v735 = vld [vmem:[#allocation8 + $0x1a0] sm:$0xff]
        %v736 = vld [vmem:[#allocation8 + $0x1a8] sm:$0xff]
        %v737 = vld [vmem:[#allocation8 + $0x1b0] sm:$0xff]
        %v738 = vld [vmem:[#allocation8 + $0x1b8] sm:$0xff]
        %v739 = vld [vmem:[#allocation8 + $0x1c0] sm:$0xff]
        %v740 = vld [vmem:[#allocation8 + $0x1c8] sm:$0xff]
        %v741 = vld [vmem:[#allocation8 + $0x1d0] sm:$0xff]
        %v742 = vld [vmem:[#allocation8 + $0x1d8] sm:$0xff]
        %v743 = vld [vmem:[#allocation8 + $0x1e0] sm:$0xff]
        %v744 = vld [vmem:[#allocation8 + $0x1e8] sm:$0xff]
        %v745 = vld [vmem:[#allocation8 + $0x1f0] sm:$0xff]
        %v746 = vld [vmem:[#allocation8 + $0x1f8] sm:$0xff]
        %747 = vmatpush.msra.mxu0 %v713
        %748 = vmatpush.msra.mxu0 %v711
        %749 = vmatpush.msra.mxu0 %v709
        %750 = vmatpush.msra.mxu0 %v707
        %751 = vmatpush.msra.mxu0 %v705
        %752 = vmatpush.msra.mxu0 %v703
        %753 = vmatpush.msra.mxu0 %v701
        %754 = vmatpush.msra.mxu0 %v699
        %755 = vmatpush.msra.mxu0 %v697
        %756 = vmatpush.msra.mxu0 %v695
        %757 = vmatpush.msra.mxu0 %v693
        %758 = vmatpush.msra.mxu0 %v691
        %759 = vmatpush.msra.mxu0 %v689
        %760 = vmatpush.msra.mxu0 %v687
        %761 = vmatpush.msra.mxu0 %v685
        %762 = vmatpush.msra.mxu0 %v683
        %763 = vmatmul.f32.gmra.mxu0 %v359
        %v764 = vpop.f32.mrf.mxu0
        %v765 = vadd.f32 0.0, %v764
        %766 = vmatmul.f32.gmra.mxu0 %v361
        %v767 = vpop.f32.mrf.mxu0
        %v768 = vadd.f32 0.0, %v767
        %769 = vmatmul.f32.gmra.mxu0 %v670
        %v770 = vpop.f32.mrf.mxu0
        %v771 = vadd.f32 0.0, %v770
        %772 = vdwg.mxu0
        %773 = vmatpush.msra.mxu0 %v745
        %774 = vmatpush.msra.mxu0 %v743
        %775 = vmatpush.msra.mxu0 %v741
        %776 = vmatpush.msra.mxu0 %v739
        %777 = vmatpush.msra.mxu0 %v737
        %778 = vmatpush.msra.mxu0 %v735
        %779 = vmatpush.msra.mxu0 %v733
        %780 = vmatpush.msra.mxu0 %v731
        %781 = vmatpush.msra.mxu0 %v729
        %782 = vmatpush.msra.mxu0 %v727
        %783 = vmatpush.msra.mxu0 %v725
        %784 = vmatpush.msra.mxu0 %v723
        %785 = vmatpush.msra.mxu0 %v721
        %786 = vmatpush.msra.mxu0 %v719
        %787 = vmatpush.msra.mxu0 %v717
        %788 = vmatpush.msra.mxu0 %v715
        %789 = vmatmul.f32.gmra.mxu0 %v360
        %v790 = vpop.f32.mrf.mxu0
        %v791 = vadd.f32 %v765, %v790
        %792 = vmatmul.f32.gmra.mxu0 %v362
        %v793 = vpop.f32.mrf.mxu0
        %v794 = vadd.f32 %v768, %v793
        %795 = vmatmul.f32.gmra.mxu0 %v682
        %v796 = vpop.f32.mrf.mxu0
        %v797 = vadd.f32 %v771, %v796
        %798 = vdwg.mxu0
        %799 = vmatpush.msra.mxu0 %v714
        %800 = vmatpush.msra.mxu0 %v712
        %801 = vmatpush.msra.mxu0 %v710
        %802 = vmatpush.msra.mxu0 %v708
        %803 = vmatpush.msra.mxu0 %v706
        %804 = vmatpush.msra.mxu0 %v704
        %805 = vmatpush.msra.mxu0 %v702
        %806 = vmatpush.msra.mxu0 %v700
        %807 = vmatpush.msra.mxu0 %v698
        %808 = vmatpush.msra.mxu0 %v696
        %809 = vmatpush.msra.mxu0 %v694
        %810 = vmatpush.msra.mxu0 %v692
        %811 = vmatpush.msra.mxu0 %v690
        %812 = vmatpush.msra.mxu0 %v688
        %813 = vmatpush.msra.mxu0 %v686
        %814 = vmatpush.msra.mxu0 %v684
        %815 = vmatmul.f32.gmra.mxu0 %v359
        %v816 = vpop.f32.mrf.mxu0
        %v817 = vadd.f32 0.0, %v816
        %818 = vmatmul.f32.gmra.mxu0 %v361
        %v819 = vpop.f32.mrf.mxu0
        %v820 = vadd.f32 0.0, %v819
        %821 = vmatmul.f32.gmra.mxu0 %v670
        %v822 = vpop.f32.mrf.mxu0
        %v823 = vadd.f32 0.0, %v822
        %824 = vdwg.mxu0
        %825 = vmatpush.msra.mxu0 %v746
        %826 = vmatpush.msra.mxu0 %v744
        %827 = vmatpush.msra.mxu0 %v742
        %828 = vmatpush.msra.mxu0 %v740
        %829 = vmatpush.msra.mxu0 %v738
        %830 = vmatpush.msra.mxu0 %v736
        %831 = vmatpush.msra.mxu0 %v734
        %832 = vmatpush.msra.mxu0 %v732
        %833 = vmatpush.msra.mxu0 %v730
        %834 = vmatpush.msra.mxu0 %v728
        %835 = vmatpush.msra.mxu0 %v726
        %836 = vmatpush.msra.mxu0 %v724
        %837 = vmatpush.msra.mxu0 %v722
        %838 = vmatpush.msra.mxu0 %v720
        %839 = vmatpush.msra.mxu0 %v718
        %840 = vmatpush.msra.mxu0 %v716
        %841 = vmatmul.f32.gmra.mxu0 %v360
        %v842 = vpop.f32.mrf.mxu0
        %v843 = vadd.f32 %v817, %v842
        %844 = vmatmul.f32.gmra.mxu0 %v362
        %v845 = vpop.f32.mrf.mxu0
        %v846 = vadd.f32 %v820, %v845
        %847 = vmatmul.f32.gmra.mxu0 %v682
        %v848 = vpop.f32.mrf.mxu0
        %v849 = vadd.f32 %v823, %v848
        %850 = vdwg.mxu0
        %s851 = scalar_lea.vmem [#allocation8], 512
        %v852 = vld [vmem:[%s851] sm:$0xff]
        %v853 = vld [vmem:[%s851 + $0x8] sm:$0xff]
        %v854 = vld [vmem:[%s851 + $0x10] sm:$0xff]
        %v855 = vld [vmem:[%s851 + $0x18] sm:$0xff]
        %v856 = vld [vmem:[%s851 + $0x20] sm:$0xff]
        %v857 = vld [vmem:[%s851 + $0x28] sm:$0xff]
        %v858 = vld [vmem:[%s851 + $0x30] sm:$0xff]
        %v859 = vld [vmem:[%s851 + $0x38] sm:$0xff]
        %v860 = vld [vmem:[%s851 + $0x40] sm:$0xff]
        %v861 = vld [vmem:[%s851 + $0x48] sm:$0xff]
        %v862 = vld [vmem:[%s851 + $0x50] sm:$0xff]
        %v863 = vld [vmem:[%s851 + $0x58] sm:$0xff]
        %v864 = vld [vmem:[%s851 + $0x60] sm:$0xff]
        %v865 = vld [vmem:[%s851 + $0x68] sm:$0xff]
        %v866 = vld [vmem:[%s851 + $0x70] sm:$0xff]
        %v867 = vld [vmem:[%s851 + $0x78] sm:$0xff]
        %v868 = vld [vmem:[%s851 + $0x80] sm:$0xff]
        %v869 = vld [vmem:[%s851 + $0x88] sm:$0xff]
        %v870 = vld [vmem:[%s851 + $0x90] sm:$0xff]
        %v871 = vld [vmem:[%s851 + $0x98] sm:$0xff]
        %v872 = vld [vmem:[%s851 + $0xa0] sm:$0xff]
        %v873 = vld [vmem:[%s851 + $0xa8] sm:$0xff]
        %v874 = vld [vmem:[%s851 + $0xb0] sm:$0xff]
        %v875 = vld [vmem:[%s851 + $0xb8] sm:$0xff]
        %v876 = vld [vmem:[%s851 + $0xc0] sm:$0xff]
        %v877 = vld [vmem:[%s851 + $0xc8] sm:$0xff]
        %v878 = vld [vmem:[%s851 + $0xd0] sm:$0xff]
        %v879 = vld [vmem:[%s851 + $0xd8] sm:$0xff]
        %v880 = vld [vmem:[%s851 + $0xe0] sm:$0xff]
        %v881 = vld [vmem:[%s851 + $0xe8] sm:$0xff]
        %v882 = vld [vmem:[%s851 + $0xf0] sm:$0xff]
        %v883 = vld [vmem:[%s851 + $0xf8] sm:$0xff]
        %v884 = vld [vmem:[%s851 + $0x100] sm:$0xff]
        %v885 = vld [vmem:[%s851 + $0x108] sm:$0xff]
        %v886 = vld [vmem:[%s851 + $0x110] sm:$0xff]
        %v887 = vld [vmem:[%s851 + $0x118] sm:$0xff]
        %v888 = vld [vmem:[%s851 + $0x120] sm:$0xff]
        %v889 = vld [vmem:[%s851 + $0x128] sm:$0xff]
        %v890 = vld [vmem:[%s851 + $0x130] sm:$0xff]
        %v891 = vld [vmem:[%s851 + $0x138] sm:$0xff]
        %v892 = vld [vmem:[%s851 + $0x140] sm:$0xff]
        %v893 = vld [vmem:[%s851 + $0x148] sm:$0xff]
        %v894 = vld [vmem:[%s851 + $0x150] sm:$0xff]
        %v895 = vld [vmem:[%s851 + $0x158] sm:$0xff]
        %v896 = vld [vmem:[%s851 + $0x160] sm:$0xff]
        %v897 = vld [vmem:[%s851 + $0x168] sm:$0xff]
        %v898 = vld [vmem:[%s851 + $0x170] sm:$0xff]
        %v899 = vld [vmem:[%s851 + $0x178] sm:$0xff]
        %v900 = vld [vmem:[%s851 + $0x180] sm:$0xff]
        %v901 = vld [vmem:[%s851 + $0x188] sm:$0xff]
        %v902 = vld [vmem:[%s851 + $0x190] sm:$0xff]
        %v903 = vld [vmem:[%s851 + $0x198] sm:$0xff]
        %v904 = vld [vmem:[%s851 + $0x1a0] sm:$0xff]
        %v905 = vld [vmem:[%s851 + $0x1a8] sm:$0xff]
        %v906 = vld [vmem:[%s851 + $0x1b0] sm:$0xff]
        %v907 = vld [vmem:[%s851 + $0x1b8] sm:$0xff]
        %v908 = vld [vmem:[%s851 + $0x1c0] sm:$0xff]
        %v909 = vld [vmem:[%s851 + $0x1c8] sm:$0xff]
        %v910 = vld [vmem:[%s851 + $0x1d0] sm:$0xff]
        %v911 = vld [vmem:[%s851 + $0x1d8] sm:$0xff]
        %v912 = vld [vmem:[%s851 + $0x1e0] sm:$0xff]
        %v913 = vld [vmem:[%s851 + $0x1e8] sm:$0xff]
        %v914 = vld [vmem:[%s851 + $0x1f0] sm:$0xff]
        %v915 = vld [vmem:[%s851 + $0x1f8] sm:$0xff]
        %916 = vmatpush.msra.mxu0 %v882
        %917 = vmatpush.msra.mxu0 %v880
        %918 = vmatpush.msra.mxu0 %v878
        %919 = vmatpush.msra.mxu0 %v876
        %920 = vmatpush.msra.mxu0 %v874
        %921 = vmatpush.msra.mxu0 %v872
        %922 = vmatpush.msra.mxu0 %v870
        %923 = vmatpush.msra.mxu0 %v868
        %924 = vmatpush.msra.mxu0 %v866
        %925 = vmatpush.msra.mxu0 %v864
        %926 = vmatpush.msra.mxu0 %v862
        %927 = vmatpush.msra.mxu0 %v860
        %928 = vmatpush.msra.mxu0 %v858
        %929 = vmatpush.msra.mxu0 %v856
        %930 = vmatpush.msra.mxu0 %v854
        %931 = vmatpush.msra.mxu0 %v852
        %932 = vmatmul.f32.gmra.mxu0 %v359
        %v933 = vpop.f32.mrf.mxu0
        %v934 = vadd.f32 0.0, %v933
        %935 = vmatmul.f32.gmra.mxu0 %v361
        %v936 = vpop.f32.mrf.mxu0
        %v937 = vadd.f32 0.0, %v936
        %938 = vmatmul.f32.gmra.mxu0 %v670
        %v939 = vpop.f32.mrf.mxu0
        %v940 = vadd.f32 0.0, %v939
        %941 = vdwg.mxu0
        %942 = vmatpush.msra.mxu0 %v914
        %943 = vmatpush.msra.mxu0 %v912
        %944 = vmatpush.msra.mxu0 %v910
        %945 = vmatpush.msra.mxu0 %v908
        %946 = vmatpush.msra.mxu0 %v906
        %947 = vmatpush.msra.mxu0 %v904
        %948 = vmatpush.msra.mxu0 %v902
        %949 = vmatpush.msra.mxu0 %v900
        %950 = vmatpush.msra.mxu0 %v898
        %951 = vmatpush.msra.mxu0 %v896
        %952 = vmatpush.msra.mxu0 %v894
        %953 = vmatpush.msra.mxu0 %v892
        %954 = vmatpush.msra.mxu0 %v890
        %955 = vmatpush.msra.mxu0 %v888
        %956 = vmatpush.msra.mxu0 %v886
        %957 = vmatpush.msra.mxu0 %v884
        %958 = vmatmul.f32.gmra.mxu0 %v360
        %v959 = vpop.f32.mrf.mxu0
        %v960 = vadd.f32 %v934, %v959
        %961 = vmatmul.f32.gmra.mxu0 %v362
        %v962 = vpop.f32.mrf.mxu0
        %v963 = vadd.f32 %v937, %v962
        %964 = vmatmul.f32.gmra.mxu0 %v682
        %v965 = vpop.f32.mrf.mxu0
        %v966 = vadd.f32 %v940, %v965
        %967 = vdwg.mxu0
        %968 = vmatpush.msra.mxu0 %v883
        %969 = vmatpush.msra.mxu0 %v881
        %970 = vmatpush.msra.mxu0 %v879
        %971 = vmatpush.msra.mxu0 %v877
        %972 = vmatpush.msra.mxu0 %v875
        %973 = vmatpush.msra.mxu0 %v873
        %974 = vmatpush.msra.mxu0 %v871
        %975 = vmatpush.msra.mxu0 %v869
        %976 = vmatpush.msra.mxu0 %v867
        %977 = vmatpush.msra.mxu0 %v865
        %978 = vmatpush.msra.mxu0 %v863
        %979 = vmatpush.msra.mxu0 %v861
        %980 = vmatpush.msra.mxu0 %v859
        %981 = vmatpush.msra.mxu0 %v857
        %982 = vmatpush.msra.mxu0 %v855
        %983 = vmatpush.msra.mxu0 %v853
        %984 = vmatmul.f32.gmra.mxu0 %v359
        %v985 = vpop.f32.mrf.mxu0
        %v986 = vadd.f32 0.0, %v985
        %987 = vmatmul.f32.gmra.mxu0 %v361
        %v988 = vpop.f32.mrf.mxu0
        %v989 = vadd.f32 0.0, %v988
        %990 = vmatmul.f32.gmra.mxu0 %v670
        %v991 = vpop.f32.mrf.mxu0
        %v992 = vadd.f32 0.0, %v991
        %993 = vdwg.mxu0
        %994 = vmatpush.msra.mxu0 %v915
        %995 = vmatpush.msra.mxu0 %v913
        %996 = vmatpush.msra.mxu0 %v911
        %997 = vmatpush.msra.mxu0 %v909
        %998 = vmatpush.msra.mxu0 %v907
        %999 = vmatpush.msra.mxu0 %v905
        %1000 = vmatpush.msra.mxu0 %v903
        %1001 = vmatpush.msra.mxu0 %v901
        %1002 = vmatpush.msra.mxu0 %v899
        %1003 = vmatpush.msra.mxu0 %v897
        %1004 = vmatpush.msra.mxu0 %v895
        %1005 = vmatpush.msra.mxu0 %v893
        %1006 = vmatpush.msra.mxu0 %v891
        %1007 = vmatpush.msra.mxu0 %v889
        %1008 = vmatpush.msra.mxu0 %v887
        %1009 = vmatpush.msra.mxu0 %v885
        %1010 = vmatmul.f32.gmra.mxu0 %v360
        %v1011 = vpop.f32.mrf.mxu0
        %v1012 = vadd.f32 %v986, %v1011
        %1013 = vmatmul.f32.gmra.mxu0 %v362
        %v1014 = vpop.f32.mrf.mxu0
        %v1015 = vadd.f32 %v989, %v1014
        %1016 = vmatmul.f32.gmra.mxu0 %v682
        %v1017 = vpop.f32.mrf.mxu0
        %v1018 = vadd.f32 %v992, %v1017
        %1019 = vdwg.mxu0
        %s1020 = scalar_lea.vmem [#allocation8], 1024
        %v1021 = vld [vmem:[%s1020] sm:$0xff]
        %v1022 = vld [vmem:[%s1020 + $0x8] sm:$0xff]
        %v1023 = vld [vmem:[%s1020 + $0x10] sm:$0xff]
        %v1024 = vld [vmem:[%s1020 + $0x18] sm:$0xff]
        %v1025 = vld [vmem:[%s1020 + $0x20] sm:$0xff]
        %v1026 = vld [vmem:[%s1020 + $0x28] sm:$0xff]
        %v1027 = vld [vmem:[%s1020 + $0x30] sm:$0xff]
        %v1028 = vld [vmem:[%s1020 + $0x38] sm:$0xff]
        %v1029 = vld [vmem:[%s1020 + $0x40] sm:$0xff]
        %v1030 = vld [vmem:[%s1020 + $0x48] sm:$0xff]
        %v1031 = vld [vmem:[%s1020 + $0x50] sm:$0xff]
        %v1032 = vld [vmem:[%s1020 + $0x58] sm:$0xff]
        %v1033 = vld [vmem:[%s1020 + $0x60] sm:$0xff]
        %v1034 = vld [vmem:[%s1020 + $0x68] sm:$0xff]
        %v1035 = vld [vmem:[%s1020 + $0x70] sm:$0xff]
        %v1036 = vld [vmem:[%s1020 + $0x78] sm:$0xff]
        %v1037 = vld [vmem:[%s1020 + $0x80] sm:$0xff]
        %v1038 = vld [vmem:[%s1020 + $0x88] sm:$0xff]
        %v1039 = vld [vmem:[%s1020 + $0x90] sm:$0xff]
        %v1040 = vld [vmem:[%s1020 + $0x98] sm:$0xff]
        %v1041 = vld [vmem:[%s1020 + $0xa0] sm:$0xff]
        %v1042 = vld [vmem:[%s1020 + $0xa8] sm:$0xff]
        %v1043 = vld [vmem:[%s1020 + $0xb0] sm:$0xff]
        %v1044 = vld [vmem:[%s1020 + $0xb8] sm:$0xff]
        %v1045 = vld [vmem:[%s1020 + $0xc0] sm:$0xff]
        %v1046 = vld [vmem:[%s1020 + $0xc8] sm:$0xff]
        %v1047 = vld [vmem:[%s1020 + $0xd0] sm:$0xff]
        %v1048 = vld [vmem:[%s1020 + $0xd8] sm:$0xff]
        %v1049 = vld [vmem:[%s1020 + $0xe0] sm:$0xff]
        %v1050 = vld [vmem:[%s1020 + $0xe8] sm:$0xff]
        %v1051 = vld [vmem:[%s1020 + $0xf0] sm:$0xff]
        %v1052 = vld [vmem:[%s1020 + $0xf8] sm:$0xff]
        %v1053 = vld [vmem:[%s1020 + $0x100] sm:$0xff]
        %v1054 = vld [vmem:[%s1020 + $0x108] sm:$0xff]
        %v1055 = vld [vmem:[%s1020 + $0x110] sm:$0xff]
        %v1056 = vld [vmem:[%s1020 + $0x118] sm:$0xff]
        %v1057 = vld [vmem:[%s1020 + $0x120] sm:$0xff]
        %v1058 = vld [vmem:[%s1020 + $0x128] sm:$0xff]
        %v1059 = vld [vmem:[%s1020 + $0x130] sm:$0xff]
        %v1060 = vld [vmem:[%s1020 + $0x138] sm:$0xff]
        %v1061 = vld [vmem:[%s1020 + $0x140] sm:$0xff]
        %v1062 = vld [vmem:[%s1020 + $0x148] sm:$0xff]
        %v1063 = vld [vmem:[%s1020 + $0x150] sm:$0xff]
        %v1064 = vld [vmem:[%s1020 + $0x158] sm:$0xff]
        %v1065 = vld [vmem:[%s1020 + $0x160] sm:$0xff]
        %v1066 = vld [vmem:[%s1020 + $0x168] sm:$0xff]
        %v1067 = vld [vmem:[%s1020 + $0x170] sm:$0xff]
        %v1068 = vld [vmem:[%s1020 + $0x178] sm:$0xff]
        %v1069 = vld [vmem:[%s1020 + $0x180] sm:$0xff]
        %v1070 = vld [vmem:[%s1020 + $0x188] sm:$0xff]
        %v1071 = vld [vmem:[%s1020 + $0x190] sm:$0xff]
        %v1072 = vld [vmem:[%s1020 + $0x198] sm:$0xff]
        %v1073 = vld [vmem:[%s1020 + $0x1a0] sm:$0xff]
        %v1074 = vld [vmem:[%s1020 + $0x1a8] sm:$0xff]
        %v1075 = vld [vmem:[%s1020 + $0x1b0] sm:$0xff]
        %v1076 = vld [vmem:[%s1020 + $0x1b8] sm:$0xff]
        %v1077 = vld [vmem:[%s1020 + $0x1c0] sm:$0xff]
        %v1078 = vld [vmem:[%s1020 + $0x1c8] sm:$0xff]
        %v1079 = vld [vmem:[%s1020 + $0x1d0] sm:$0xff]
        %v1080 = vld [vmem:[%s1020 + $0x1d8] sm:$0xff]
        %v1081 = vld [vmem:[%s1020 + $0x1e0] sm:$0xff]
        %v1082 = vld [vmem:[%s1020 + $0x1e8] sm:$0xff]
        %v1083 = vld [vmem:[%s1020 + $0x1f0] sm:$0xff]
        %v1084 = vld [vmem:[%s1020 + $0x1f8] sm:$0xff]
        %1085 = vmatpush.msra.mxu0 %v1051
        %1086 = vmatpush.msra.mxu0 %v1049
        %1087 = vmatpush.msra.mxu0 %v1047
        %1088 = vmatpush.msra.mxu0 %v1045
        %1089 = vmatpush.msra.mxu0 %v1043
        %1090 = vmatpush.msra.mxu0 %v1041
        %1091 = vmatpush.msra.mxu0 %v1039
        %1092 = vmatpush.msra.mxu0 %v1037
        %1093 = vmatpush.msra.mxu0 %v1035
        %1094 = vmatpush.msra.mxu0 %v1033
        %1095 = vmatpush.msra.mxu0 %v1031
        %1096 = vmatpush.msra.mxu0 %v1029
        %1097 = vmatpush.msra.mxu0 %v1027
        %1098 = vmatpush.msra.mxu0 %v1025
        %1099 = vmatpush.msra.mxu0 %v1023
        %1100 = vmatpush.msra.mxu0 %v1021
        %1101 = vmatmul.f32.gmra.mxu0 %v359
        %v1102 = vpop.f32.mrf.mxu0
        %v1103 = vadd.f32 0.0, %v1102
        %1104 = vmatmul.f32.gmra.mxu0 %v361
        %v1105 = vpop.f32.mrf.mxu0
        %v1106 = vadd.f32 0.0, %v1105
        %1107 = vmatmul.f32.gmra.mxu0 %v670
        %v1108 = vpop.f32.mrf.mxu0
        %v1109 = vadd.f32 0.0, %v1108
        %1110 = vdwg.mxu0
        %1111 = vmatpush.msra.mxu0 %v1083
        %1112 = vmatpush.msra.mxu0 %v1081
        %1113 = vmatpush.msra.mxu0 %v1079
        %1114 = vmatpush.msra.mxu0 %v1077
        %1115 = vmatpush.msra.mxu0 %v1075
        %1116 = vmatpush.msra.mxu0 %v1073
        %1117 = vmatpush.msra.mxu0 %v1071
        %1118 = vmatpush.msra.mxu0 %v1069
        %1119 = vmatpush.msra.mxu0 %v1067
        %1120 = vmatpush.msra.mxu0 %v1065
        %1121 = vmatpush.msra.mxu0 %v1063
        %1122 = vmatpush.msra.mxu0 %v1061
        %1123 = vmatpush.msra.mxu0 %v1059
        %1124 = vmatpush.msra.mxu0 %v1057
        %1125 = vmatpush.msra.mxu0 %v1055
        %1126 = vmatpush.msra.mxu0 %v1053
        %1127 = vmatmul.f32.gmra.mxu0 %v360
        %v1128 = vpop.f32.mrf.mxu0
        %v1129 = vadd.f32 %v1103, %v1128
        %1130 = vmatmul.f32.gmra.mxu0 %v362
        %v1131 = vpop.f32.mrf.mxu0
        %v1132 = vadd.f32 %v1106, %v1131
        %1133 = vmatmul.f32.gmra.mxu0 %v682
        %v1134 = vpop.f32.mrf.mxu0
        %v1135 = vadd.f32 %v1109, %v1134
        %1136 = vdwg.mxu0
        %1137 = vmatpush.msra.mxu0 %v1052
        %1138 = vmatpush.msra.mxu0 %v1050
        %1139 = vmatpush.msra.mxu0 %v1048
        %1140 = vmatpush.msra.mxu0 %v1046
        %1141 = vmatpush.msra.mxu0 %v1044
        %1142 = vmatpush.msra.mxu0 %v1042
        %1143 = vmatpush.msra.mxu0 %v1040
        %1144 = vmatpush.msra.mxu0 %v1038
        %1145 = vmatpush.msra.mxu0 %v1036
        %1146 = vmatpush.msra.mxu0 %v1034
        %1147 = vmatpush.msra.mxu0 %v1032
        %1148 = vmatpush.msra.mxu0 %v1030
        %1149 = vmatpush.msra.mxu0 %v1028
        %1150 = vmatpush.msra.mxu0 %v1026
        %1151 = vmatpush.msra.mxu0 %v1024
        %1152 = vmatpush.msra.mxu0 %v1022
        %1153 = vmatmul.f32.gmra.mxu0 %v359
        %v1154 = vpop.f32.mrf.mxu0
        %v1155 = vadd.f32 0.0, %v1154
        %1156 = vmatmul.f32.gmra.mxu0 %v361
        %v1157 = vpop.f32.mrf.mxu0
        %v1158 = vadd.f32 0.0, %v1157
        %1159 = vmatmul.f32.gmra.mxu0 %v670
        %v1160 = vpop.f32.mrf.mxu0
        %v1161 = vadd.f32 0.0, %v1160
        %1162 = vdwg.mxu0
        %1163 = vmatpush.msra.mxu0 %v1084
        %1164 = vmatpush.msra.mxu0 %v1082
        %1165 = vmatpush.msra.mxu0 %v1080
        %1166 = vmatpush.msra.mxu0 %v1078
        %1167 = vmatpush.msra.mxu0 %v1076
        %1168 = vmatpush.msra.mxu0 %v1074
        %1169 = vmatpush.msra.mxu0 %v1072
        %1170 = vmatpush.msra.mxu0 %v1070
        %1171 = vmatpush.msra.mxu0 %v1068
        %1172 = vmatpush.msra.mxu0 %v1066
        %1173 = vmatpush.msra.mxu0 %v1064
        %1174 = vmatpush.msra.mxu0 %v1062
        %1175 = vmatpush.msra.mxu0 %v1060
        %1176 = vmatpush.msra.mxu0 %v1058
        %1177 = vmatpush.msra.mxu0 %v1056
        %1178 = vmatpush.msra.mxu0 %v1054
        %1179 = vmatmul.f32.gmra.mxu0 %v360
        %v1180 = vpop.f32.mrf.mxu0
        %v1181 = vadd.f32 %v1155, %v1180
        %1182 = vmatmul.f32.gmra.mxu0 %v362
        %v1183 = vpop.f32.mrf.mxu0
        %v1184 = vadd.f32 %v1158, %v1183
        %1185 = vmatmul.f32.gmra.mxu0 %v682
        %v1186 = vpop.f32.mrf.mxu0
        %v1187 = vadd.f32 %v1161, %v1186
        %1188 = vdwg.mxu0
        %s1189 = scalar_lea.vmem [#allocation8], 1536
        %v1190 = vld [vmem:[%s1189] sm:$0xff]
        %v1191 = vld [vmem:[%s1189 + $0x8] sm:$0xff]
        %v1192 = vld [vmem:[%s1189 + $0x10] sm:$0xff]
        %v1193 = vld [vmem:[%s1189 + $0x18] sm:$0xff]
        %v1194 = vld [vmem:[%s1189 + $0x20] sm:$0xff]
        %v1195 = vld [vmem:[%s1189 + $0x28] sm:$0xff]
        %v1196 = vld [vmem:[%s1189 + $0x30] sm:$0xff]
        %v1197 = vld [vmem:[%s1189 + $0x38] sm:$0xff]
        %v1198 = vld [vmem:[%s1189 + $0x40] sm:$0xff]
        %v1199 = vld [vmem:[%s1189 + $0x48] sm:$0xff]
        %v1200 = vld [vmem:[%s1189 + $0x50] sm:$0xff]
        %v1201 = vld [vmem:[%s1189 + $0x58] sm:$0xff]
        %v1202 = vld [vmem:[%s1189 + $0x60] sm:$0xff]
        %v1203 = vld [vmem:[%s1189 + $0x68] sm:$0xff]
        %v1204 = vld [vmem:[%s1189 + $0x70] sm:$0xff]
        %v1205 = vld [vmem:[%s1189 + $0x78] sm:$0xff]
        %v1206 = vld [vmem:[%s1189 + $0x80] sm:$0xff]
        %v1207 = vld [vmem:[%s1189 + $0x88] sm:$0xff]
        %v1208 = vld [vmem:[%s1189 + $0x90] sm:$0xff]
        %v1209 = vld [vmem:[%s1189 + $0x98] sm:$0xff]
        %v1210 = vld [vmem:[%s1189 + $0xa0] sm:$0xff]
        %v1211 = vld [vmem:[%s1189 + $0xa8] sm:$0xff]
        %v1212 = vld [vmem:[%s1189 + $0xb0] sm:$0xff]
        %v1213 = vld [vmem:[%s1189 + $0xb8] sm:$0xff]
        %v1214 = vld [vmem:[%s1189 + $0xc0] sm:$0xff]
        %v1215 = vld [vmem:[%s1189 + $0xc8] sm:$0xff]
        %v1216 = vld [vmem:[%s1189 + $0xd0] sm:$0xff]
        %v1217 = vld [vmem:[%s1189 + $0xd8] sm:$0xff]
        %v1218 = vld [vmem:[%s1189 + $0xe0] sm:$0xff]
        %v1219 = vld [vmem:[%s1189 + $0xe8] sm:$0xff]
        %v1220 = vld [vmem:[%s1189 + $0xf0] sm:$0xff]
        %v1221 = vld [vmem:[%s1189 + $0xf8] sm:$0xff]
        %v1222 = vld [vmem:[%s1189 + $0x100] sm:$0xff]
        %v1223 = vld [vmem:[%s1189 + $0x108] sm:$0xff]
        %v1224 = vld [vmem:[%s1189 + $0x110] sm:$0xff]
        %v1225 = vld [vmem:[%s1189 + $0x118] sm:$0xff]
        %v1226 = vld [vmem:[%s1189 + $0x120] sm:$0xff]
        %v1227 = vld [vmem:[%s1189 + $0x128] sm:$0xff]
        %v1228 = vld [vmem:[%s1189 + $0x130] sm:$0xff]
        %v1229 = vld [vmem:[%s1189 + $0x138] sm:$0xff]
        %v1230 = vld [vmem:[%s1189 + $0x140] sm:$0xff]
        %v1231 = vld [vmem:[%s1189 + $0x148] sm:$0xff]
        %v1232 = vld [vmem:[%s1189 + $0x150] sm:$0xff]
        %v1233 = vld [vmem:[%s1189 + $0x158] sm:$0xff]
        %v1234 = vld [vmem:[%s1189 + $0x160] sm:$0xff]
        %v1235 = vld [vmem:[%s1189 + $0x168] sm:$0xff]
        %v1236 = vld [vmem:[%s1189 + $0x170] sm:$0xff]
        %v1237 = vld [vmem:[%s1189 + $0x178] sm:$0xff]
        %v1238 = vld [vmem:[%s1189 + $0x180] sm:$0xff]
        %v1239 = vld [vmem:[%s1189 + $0x188] sm:$0xff]
        %v1240 = vld [vmem:[%s1189 + $0x190] sm:$0xff]
        %v1241 = vld [vmem:[%s1189 + $0x198] sm:$0xff]
        %v1242 = vld [vmem:[%s1189 + $0x1a0] sm:$0xff]
        %v1243 = vld [vmem:[%s1189 + $0x1a8] sm:$0xff]
        %v1244 = vld [vmem:[%s1189 + $0x1b0] sm:$0xff]
        %v1245 = vld [vmem:[%s1189 + $0x1b8] sm:$0xff]
        %v1246 = vld [vmem:[%s1189 + $0x1c0] sm:$0xff]
        %v1247 = vld [vmem:[%s1189 + $0x1c8] sm:$0xff]
        %v1248 = vld [vmem:[%s1189 + $0x1d0] sm:$0xff]
        %v1249 = vld [vmem:[%s1189 + $0x1d8] sm:$0xff]
        %v1250 = vld [vmem:[%s1189 + $0x1e0] sm:$0xff]
        %v1251 = vld [vmem:[%s1189 + $0x1e8] sm:$0xff]
        %v1252 = vld [vmem:[%s1189 + $0x1f0] sm:$0xff]
        %v1253 = vld [vmem:[%s1189 + $0x1f8] sm:$0xff]
        %1254 = vmatpush.msra.mxu0 %v1220
        %1255 = vmatpush.msra.mxu0 %v1218
        %1256 = vmatpush.msra.mxu0 %v1216
        %1257 = vmatpush.msra.mxu0 %v1214
        %1258 = vmatpush.msra.mxu0 %v1212
        %1259 = vmatpush.msra.mxu0 %v1210
        %1260 = vmatpush.msra.mxu0 %v1208
        %1261 = vmatpush.msra.mxu0 %v1206
        %1262 = vmatpush.msra.mxu0 %v1204
        %1263 = vmatpush.msra.mxu0 %v1202
        %1264 = vmatpush.msra.mxu0 %v1200
        %1265 = vmatpush.msra.mxu0 %v1198
        %1266 = vmatpush.msra.mxu0 %v1196
        %1267 = vmatpush.msra.mxu0 %v1194
        %1268 = vmatpush.msra.mxu0 %v1192
        %1269 = vmatpush.msra.mxu0 %v1190
        %1270 = vmatmul.f32.gmra.mxu0 %v359
        %v1271 = vpop.f32.mrf.mxu0
        %v1272 = vadd.f32 0.0, %v1271
        %1273 = vmatmul.f32.gmra.mxu0 %v361
        %v1274 = vpop.f32.mrf.mxu0
        %v1275 = vadd.f32 0.0, %v1274
        %1276 = vmatmul.f32.gmra.mxu0 %v670
        %v1277 = vpop.f32.mrf.mxu0
        %v1278 = vadd.f32 0.0, %v1277
        %1279 = vdwg.mxu0
        %1280 = vmatpush.msra.mxu0 %v1252
        %1281 = vmatpush.msra.mxu0 %v1250
        %1282 = vmatpush.msra.mxu0 %v1248
        %1283 = vmatpush.msra.mxu0 %v1246
        %1284 = vmatpush.msra.mxu0 %v1244
        %1285 = vmatpush.msra.mxu0 %v1242
        %1286 = vmatpush.msra.mxu0 %v1240
        %1287 = vmatpush.msra.mxu0 %v1238
        %1288 = vmatpush.msra.mxu0 %v1236
        %1289 = vmatpush.msra.mxu0 %v1234
        %1290 = vmatpush.msra.mxu0 %v1232
        %1291 = vmatpush.msra.mxu0 %v1230
        %1292 = vmatpush.msra.mxu0 %v1228
        %1293 = vmatpush.msra.mxu0 %v1226
        %1294 = vmatpush.msra.mxu0 %v1224
        %1295 = vmatpush.msra.mxu0 %v1222
        %1296 = vmatmul.f32.gmra.mxu0 %v360
        %v1297 = vpop.f32.mrf.mxu0
        %v1298 = vadd.f32 %v1272, %v1297
        %1299 = vmatmul.f32.gmra.mxu0 %v362
        %v1300 = vpop.f32.mrf.mxu0
        %v1301 = vadd.f32 %v1275, %v1300
        %1302 = vmatmul.f32.gmra.mxu0 %v682
        %v1303 = vpop.f32.mrf.mxu0
        %v1304 = vadd.f32 %v1278, %v1303
        %1305 = vdwg.mxu0
        %1306 = vmatpush.msra.mxu0 %v1221
        %1307 = vmatpush.msra.mxu0 %v1219
        %1308 = vmatpush.msra.mxu0 %v1217
        %1309 = vmatpush.msra.mxu0 %v1215
        %1310 = vmatpush.msra.mxu0 %v1213
        %1311 = vmatpush.msra.mxu0 %v1211
        %1312 = vmatpush.msra.mxu0 %v1209
        %1313 = vmatpush.msra.mxu0 %v1207
        %1314 = vmatpush.msra.mxu0 %v1205
        %1315 = vmatpush.msra.mxu0 %v1203
        %1316 = vmatpush.msra.mxu0 %v1201
        %1317 = vmatpush.msra.mxu0 %v1199
        %1318 = vmatpush.msra.mxu0 %v1197
        %1319 = vmatpush.msra.mxu0 %v1195
        %1320 = vmatpush.msra.mxu0 %v1193
        %1321 = vmatpush.msra.mxu0 %v1191
        %1322 = vmatmul.f32.gmra.mxu0 %v359
        %v1323 = vpop.f32.mrf.mxu0
        %v1324 = vadd.f32 0.0, %v1323
        %1325 = vmatmul.f32.gmra.mxu0 %v361
        %v1326 = vpop.f32.mrf.mxu0
        %v1327 = vadd.f32 0.0, %v1326
        %1328 = vmatmul.f32.gmra.mxu0 %v670
        %v1329 = vpop.f32.mrf.mxu0
        %v1330 = vadd.f32 0.0, %v1329
        %1331 = vdwg.mxu0
        %1332 = vmatpush.msra.mxu0 %v1253
        %1333 = vmatpush.msra.mxu0 %v1251
        %1334 = vmatpush.msra.mxu0 %v1249
        %1335 = vmatpush.msra.mxu0 %v1247
        %1336 = vmatpush.msra.mxu0 %v1245
        %1337 = vmatpush.msra.mxu0 %v1243
        %1338 = vmatpush.msra.mxu0 %v1241
        %1339 = vmatpush.msra.mxu0 %v1239
        %1340 = vmatpush.msra.mxu0 %v1237
        %1341 = vmatpush.msra.mxu0 %v1235
        %1342 = vmatpush.msra.mxu0 %v1233
        %1343 = vmatpush.msra.mxu0 %v1231
        %1344 = vmatpush.msra.mxu0 %v1229
        %1345 = vmatpush.msra.mxu0 %v1227
        %1346 = vmatpush.msra.mxu0 %v1225
        %1347 = vmatpush.msra.mxu0 %v1223
        %1348 = vmatmul.f32.gmra.mxu0 %v360
        %v1349 = vpop.f32.mrf.mxu0
        %v1350 = vadd.f32 %v1324, %v1349
        %1351 = vmatmul.f32.gmra.mxu0 %v362
        %v1352 = vpop.f32.mrf.mxu0
        %v1353 = vadd.f32 %v1327, %v1352
        %1354 = vmatmul.f32.gmra.mxu0 %v682
        %v1355 = vpop.f32.mrf.mxu0
        %v1356 = vadd.f32 %v1330, %v1355
        %1357 = vdwg.mxu0
        %s1358 = scalar_lea.vmem [#allocation8], 2048
        %v1359 = vld [vmem:[%s1358] sm:$0xff]
        %v1360 = vld [vmem:[%s1358 + $0x8] sm:$0xff]
        %v1361 = vld [vmem:[%s1358 + $0x10] sm:$0xff]
        %v1362 = vld [vmem:[%s1358 + $0x18] sm:$0xff]
        %v1363 = vld [vmem:[%s1358 + $0x20] sm:$0xff]
        %v1364 = vld [vmem:[%s1358 + $0x28] sm:$0xff]
        %v1365 = vld [vmem:[%s1358 + $0x30] sm:$0xff]
        %v1366 = vld [vmem:[%s1358 + $0x38] sm:$0xff]
        %v1367 = vld [vmem:[%s1358 + $0x40] sm:$0xff]
        %v1368 = vld [vmem:[%s1358 + $0x48] sm:$0xff]
        %v1369 = vld [vmem:[%s1358 + $0x50] sm:$0xff]
        %v1370 = vld [vmem:[%s1358 + $0x58] sm:$0xff]
        %v1371 = vld [vmem:[%s1358 + $0x60] sm:$0xff]
        %v1372 = vld [vmem:[%s1358 + $0x68] sm:$0xff]
        %v1373 = vld [vmem:[%s1358 + $0x70] sm:$0xff]
        %v1374 = vld [vmem:[%s1358 + $0x78] sm:$0xff]
        %v1375 = vld [vmem:[%s1358 + $0x80] sm:$0xff]
        %v1376 = vld [vmem:[%s1358 + $0x88] sm:$0xff]
        %v1377 = vld [vmem:[%s1358 + $0x90] sm:$0xff]
        %v1378 = vld [vmem:[%s1358 + $0x98] sm:$0xff]
        %v1379 = vld [vmem:[%s1358 + $0xa0] sm:$0xff]
        %v1380 = vld [vmem:[%s1358 + $0xa8] sm:$0xff]
        %v1381 = vld [vmem:[%s1358 + $0xb0] sm:$0xff]
        %v1382 = vld [vmem:[%s1358 + $0xb8] sm:$0xff]
        %v1383 = vld [vmem:[%s1358 + $0xc0] sm:$0xff]
        %v1384 = vld [vmem:[%s1358 + $0xc8] sm:$0xff]
        %v1385 = vld [vmem:[%s1358 + $0xd0] sm:$0xff]
        %v1386 = vld [vmem:[%s1358 + $0xd8] sm:$0xff]
        %v1387 = vld [vmem:[%s1358 + $0xe0] sm:$0xff]
        %v1388 = vld [vmem:[%s1358 + $0xe8] sm:$0xff]
        %v1389 = vld [vmem:[%s1358 + $0xf0] sm:$0xff]
        %v1390 = vld [vmem:[%s1358 + $0xf8] sm:$0xff]
        %v1391 = vld [vmem:[%s1358 + $0x100] sm:$0xff]
        %v1392 = vld [vmem:[%s1358 + $0x108] sm:$0xff]
        %v1393 = vld [vmem:[%s1358 + $0x110] sm:$0xff]
        %v1394 = vld [vmem:[%s1358 + $0x118] sm:$0xff]
        %v1395 = vld [vmem:[%s1358 + $0x120] sm:$0xff]
        %v1396 = vld [vmem:[%s1358 + $0x128] sm:$0xff]
        %v1397 = vld [vmem:[%s1358 + $0x130] sm:$0xff]
        %v1398 = vld [vmem:[%s1358 + $0x138] sm:$0xff]
        %v1399 = vld [vmem:[%s1358 + $0x140] sm:$0xff]
        %v1400 = vld [vmem:[%s1358 + $0x148] sm:$0xff]
        %v1401 = vld [vmem:[%s1358 + $0x150] sm:$0xff]
        %v1402 = vld [vmem:[%s1358 + $0x158] sm:$0xff]
        %v1403 = vld [vmem:[%s1358 + $0x160] sm:$0xff]
        %v1404 = vld [vmem:[%s1358 + $0x168] sm:$0xff]
        %v1405 = vld [vmem:[%s1358 + $0x170] sm:$0xff]
        %v1406 = vld [vmem:[%s1358 + $0x178] sm:$0xff]
        %v1407 = vld [vmem:[%s1358 + $0x180] sm:$0xff]
        %v1408 = vld [vmem:[%s1358 + $0x188] sm:$0xff]
        %v1409 = vld [vmem:[%s1358 + $0x190] sm:$0xff]
        %v1410 = vld [vmem:[%s1358 + $0x198] sm:$0xff]
        %v1411 = vld [vmem:[%s1358 + $0x1a0] sm:$0xff]
        %v1412 = vld [vmem:[%s1358 + $0x1a8] sm:$0xff]
        %v1413 = vld [vmem:[%s1358 + $0x1b0] sm:$0xff]
        %v1414 = vld [vmem:[%s1358 + $0x1b8] sm:$0xff]
        %v1415 = vld [vmem:[%s1358 + $0x1c0] sm:$0xff]
        %v1416 = vld [vmem:[%s1358 + $0x1c8] sm:$0xff]
        %v1417 = vld [vmem:[%s1358 + $0x1d0] sm:$0xff]
        %v1418 = vld [vmem:[%s1358 + $0x1d8] sm:$0xff]
        %v1419 = vld [vmem:[%s1358 + $0x1e0] sm:$0xff]
        %v1420 = vld [vmem:[%s1358 + $0x1e8] sm:$0xff]
        %v1421 = vld [vmem:[%s1358 + $0x1f0] sm:$0xff]
        %v1422 = vld [vmem:[%s1358 + $0x1f8] sm:$0xff]
        %1423 = vmatpush.msra.mxu0 %v1389
        %1424 = vmatpush.msra.mxu0 %v1387
        %1425 = vmatpush.msra.mxu0 %v1385
        %1426 = vmatpush.msra.mxu0 %v1383
        %1427 = vmatpush.msra.mxu0 %v1381
        %1428 = vmatpush.msra.mxu0 %v1379
        %1429 = vmatpush.msra.mxu0 %v1377
        %1430 = vmatpush.msra.mxu0 %v1375
        %1431 = vmatpush.msra.mxu0 %v1373
        %1432 = vmatpush.msra.mxu0 %v1371
        %1433 = vmatpush.msra.mxu0 %v1369
        %1434 = vmatpush.msra.mxu0 %v1367
        %1435 = vmatpush.msra.mxu0 %v1365
        %1436 = vmatpush.msra.mxu0 %v1363
        %1437 = vmatpush.msra.mxu0 %v1361
        %1438 = vmatpush.msra.mxu0 %v1359
        %1439 = vmatmul.f32.gmra.mxu0 %v359
        %v1440 = vpop.f32.mrf.mxu0
        %v1441 = vadd.f32 0.0, %v1440
        %1442 = vmatmul.f32.gmra.mxu0 %v361
        %v1443 = vpop.f32.mrf.mxu0
        %v1444 = vadd.f32 0.0, %v1443
        %1445 = vmatmul.f32.gmra.mxu0 %v670
        %v1446 = vpop.f32.mrf.mxu0
        %v1447 = vadd.f32 0.0, %v1446
        %1448 = vdwg.mxu0
        %1449 = vmatpush.msra.mxu0 %v1421
        %1450 = vmatpush.msra.mxu0 %v1419
        %1451 = vmatpush.msra.mxu0 %v1417
        %1452 = vmatpush.msra.mxu0 %v1415
        %1453 = vmatpush.msra.mxu0 %v1413
        %1454 = vmatpush.msra.mxu0 %v1411
        %1455 = vmatpush.msra.mxu0 %v1409
        %1456 = vmatpush.msra.mxu0 %v1407
        %1457 = vmatpush.msra.mxu0 %v1405
        %1458 = vmatpush.msra.mxu0 %v1403
        %1459 = vmatpush.msra.mxu0 %v1401
        %1460 = vmatpush.msra.mxu0 %v1399
        %1461 = vmatpush.msra.mxu0 %v1397
        %1462 = vmatpush.msra.mxu0 %v1395
        %1463 = vmatpush.msra.mxu0 %v1393
        %1464 = vmatpush.msra.mxu0 %v1391
        %1465 = vmatmul.f32.gmra.mxu0 %v360
        %v1466 = vpop.f32.mrf.mxu0
        %v1467 = vadd.f32 %v1441, %v1466
        %1468 = vmatmul.f32.gmra.mxu0 %v362
        %v1469 = vpop.f32.mrf.mxu0
        %v1470 = vadd.f32 %v1444, %v1469
        %1471 = vmatmul.f32.gmra.mxu0 %v682
        %v1472 = vpop.f32.mrf.mxu0
        %v1473 = vadd.f32 %v1447, %v1472
        %1474 = vdwg.mxu0
        %1475 = vmatpush.msra.mxu0 %v1390
        %1476 = vmatpush.msra.mxu0 %v1388
        %1477 = vmatpush.msra.mxu0 %v1386
        %1478 = vmatpush.msra.mxu0 %v1384
        %1479 = vmatpush.msra.mxu0 %v1382
        %1480 = vmatpush.msra.mxu0 %v1380
        %1481 = vmatpush.msra.mxu0 %v1378
        %1482 = vmatpush.msra.mxu0 %v1376
        %1483 = vmatpush.msra.mxu0 %v1374
        %1484 = vmatpush.msra.mxu0 %v1372
        %1485 = vmatpush.msra.mxu0 %v1370
        %1486 = vmatpush.msra.mxu0 %v1368
        %1487 = vmatpush.msra.mxu0 %v1366
        %1488 = vmatpush.msra.mxu0 %v1364
        %1489 = vmatpush.msra.mxu0 %v1362
        %1490 = vmatpush.msra.mxu0 %v1360
        %1491 = vmatmul.f32.gmra.mxu0 %v359
        %v1492 = vpop.f32.mrf.mxu0
        %v1493 = vadd.f32 0.0, %v1492
        %1494 = vmatmul.f32.gmra.mxu0 %v361
        %v1495 = vpop.f32.mrf.mxu0
        %v1496 = vadd.f32 0.0, %v1495
        %1497 = vmatmul.f32.gmra.mxu0 %v670
        %v1498 = vpop.f32.mrf.mxu0
        %v1499 = vadd.f32 0.0, %v1498
        %1500 = vdwg.mxu0
        %1501 = vmatpush.msra.mxu0 %v1422
        %1502 = vmatpush.msra.mxu0 %v1420
        %1503 = vmatpush.msra.mxu0 %v1418
        %1504 = vmatpush.msra.mxu0 %v1416
        %1505 = vmatpush.msra.mxu0 %v1414
        %1506 = vmatpush.msra.mxu0 %v1412
        %1507 = vmatpush.msra.mxu0 %v1410
        %1508 = vmatpush.msra.mxu0 %v1408
        %1509 = vmatpush.msra.mxu0 %v1406
        %1510 = vmatpush.msra.mxu0 %v1404
        %1511 = vmatpush.msra.mxu0 %v1402
        %1512 = vmatpush.msra.mxu0 %v1400
        %1513 = vmatpush.msra.mxu0 %v1398
        %1514 = vmatpush.msra.mxu0 %v1396
        %1515 = vmatpush.msra.mxu0 %v1394
        %1516 = vmatpush.msra.mxu0 %v1392
        %1517 = vmatmul.f32.gmra.mxu0 %v360
        %v1518 = vpop.f32.mrf.mxu0
        %v1519 = vadd.f32 %v1493, %v1518
        %1520 = vmatmul.f32.gmra.mxu0 %v362
        %v1521 = vpop.f32.mrf.mxu0
        %v1522 = vadd.f32 %v1496, %v1521
        %1523 = vmatmul.f32.gmra.mxu0 %v682
        %v1524 = vpop.f32.mrf.mxu0
        %v1525 = vadd.f32 %v1499, %v1524
        %1526 = vdwg.mxu0
        %s1527 = scalar_lea.vmem [#allocation8], 2560
        %v1528 = vld [vmem:[%s1527] sm:$0xff]
        %v1529 = vld [vmem:[%s1527 + $0x8] sm:$0xff]
        %v1530 = vld [vmem:[%s1527 + $0x10] sm:$0xff]
        %v1531 = vld [vmem:[%s1527 + $0x18] sm:$0xff]
        %v1532 = vld [vmem:[%s1527 + $0x20] sm:$0xff]
        %v1533 = vld [vmem:[%s1527 + $0x28] sm:$0xff]
        %v1534 = vld [vmem:[%s1527 + $0x30] sm:$0xff]
        %v1535 = vld [vmem:[%s1527 + $0x38] sm:$0xff]
        %v1536 = vld [vmem:[%s1527 + $0x40] sm:$0xff]
        %v1537 = vld [vmem:[%s1527 + $0x48] sm:$0xff]
        %v1538 = vld [vmem:[%s1527 + $0x50] sm:$0xff]
        %v1539 = vld [vmem:[%s1527 + $0x58] sm:$0xff]
        %v1540 = vld [vmem:[%s1527 + $0x60] sm:$0xff]
        %v1541 = vld [vmem:[%s1527 + $0x68] sm:$0xff]
        %v1542 = vld [vmem:[%s1527 + $0x70] sm:$0xff]
        %v1543 = vld [vmem:[%s1527 + $0x78] sm:$0xff]
        %v1544 = vld [vmem:[%s1527 + $0x80] sm:$0xff]
        %v1545 = vld [vmem:[%s1527 + $0x88] sm:$0xff]
        %v1546 = vld [vmem:[%s1527 + $0x90] sm:$0xff]
        %v1547 = vld [vmem:[%s1527 + $0x98] sm:$0xff]
        %v1548 = vld [vmem:[%s1527 + $0xa0] sm:$0xff]
        %v1549 = vld [vmem:[%s1527 + $0xa8] sm:$0xff]
        %v1550 = vld [vmem:[%s1527 + $0xb0] sm:$0xff]
        %v1551 = vld [vmem:[%s1527 + $0xb8] sm:$0xff]
        %v1552 = vld [vmem:[%s1527 + $0xc0] sm:$0xff]
        %v1553 = vld [vmem:[%s1527 + $0xc8] sm:$0xff]
        %v1554 = vld [vmem:[%s1527 + $0xd0] sm:$0xff]
        %v1555 = vld [vmem:[%s1527 + $0xd8] sm:$0xff]
        %v1556 = vld [vmem:[%s1527 + $0xe0] sm:$0xff]
        %v1557 = vld [vmem:[%s1527 + $0xe8] sm:$0xff]
        %v1558 = vld [vmem:[%s1527 + $0xf0] sm:$0xff]
        %v1559 = vld [vmem:[%s1527 + $0xf8] sm:$0xff]
        %v1560 = vld [vmem:[%s1527 + $0x100] sm:$0xff]
        %v1561 = vld [vmem:[%s1527 + $0x108] sm:$0xff]
        %v1562 = vld [vmem:[%s1527 + $0x110] sm:$0xff]
        %v1563 = vld [vmem:[%s1527 + $0x118] sm:$0xff]
        %v1564 = vld [vmem:[%s1527 + $0x120] sm:$0xff]
        %v1565 = vld [vmem:[%s1527 + $0x128] sm:$0xff]
        %v1566 = vld [vmem:[%s1527 + $0x130] sm:$0xff]
        %v1567 = vld [vmem:[%s1527 + $0x138] sm:$0xff]
        %v1568 = vld [vmem:[%s1527 + $0x140] sm:$0xff]
        %v1569 = vld [vmem:[%s1527 + $0x148] sm:$0xff]
        %v1570 = vld [vmem:[%s1527 + $0x150] sm:$0xff]
        %v1571 = vld [vmem:[%s1527 + $0x158] sm:$0xff]
        %v1572 = vld [vmem:[%s1527 + $0x160] sm:$0xff]
        %v1573 = vld [vmem:[%s1527 + $0x168] sm:$0xff]
        %v1574 = vld [vmem:[%s1527 + $0x170] sm:$0xff]
        %v1575 = vld [vmem:[%s1527 + $0x178] sm:$0xff]
        %v1576 = vld [vmem:[%s1527 + $0x180] sm:$0xff]
        %v1577 = vld [vmem:[%s1527 + $0x188] sm:$0xff]
        %v1578 = vld [vmem:[%s1527 + $0x190] sm:$0xff]
        %v1579 = vld [vmem:[%s1527 + $0x198] sm:$0xff]
        %v1580 = vld [vmem:[%s1527 + $0x1a0] sm:$0xff]
        %v1581 = vld [vmem:[%s1527 + $0x1a8] sm:$0xff]
        %v1582 = vld [vmem:[%s1527 + $0x1b0] sm:$0xff]
        %v1583 = vld [vmem:[%s1527 + $0x1b8] sm:$0xff]
        %v1584 = vld [vmem:[%s1527 + $0x1c0] sm:$0xff]
        %v1585 = vld [vmem:[%s1527 + $0x1c8] sm:$0xff]
        %v1586 = vld [vmem:[%s1527 + $0x1d0] sm:$0xff]
        %v1587 = vld [vmem:[%s1527 + $0x1d8] sm:$0xff]
        %v1588 = vld [vmem:[%s1527 + $0x1e0] sm:$0xff]
        %v1589 = vld [vmem:[%s1527 + $0x1e8] sm:$0xff]
        %v1590 = vld [vmem:[%s1527 + $0x1f0] sm:$0xff]
        %v1591 = vld [vmem:[%s1527 + $0x1f8] sm:$0xff]
        %1592 = vmatpush.msra.mxu0 %v1558
        %1593 = vmatpush.msra.mxu0 %v1556
        %1594 = vmatpush.msra.mxu0 %v1554
        %1595 = vmatpush.msra.mxu0 %v1552
        %1596 = vmatpush.msra.mxu0 %v1550
        %1597 = vmatpush.msra.mxu0 %v1548
        %1598 = vmatpush.msra.mxu0 %v1546
        %1599 = vmatpush.msra.mxu0 %v1544
        %1600 = vmatpush.msra.mxu0 %v1542
        %1601 = vmatpush.msra.mxu0 %v1540
        %1602 = vmatpush.msra.mxu0 %v1538
        %1603 = vmatpush.msra.mxu0 %v1536
        %1604 = vmatpush.msra.mxu0 %v1534
        %1605 = vmatpush.msra.mxu0 %v1532
        %1606 = vmatpush.msra.mxu0 %v1530
        %1607 = vmatpush.msra.mxu0 %v1528
        %1608 = vmatmul.f32.gmra.mxu0 %v359
        %v1609 = vpop.f32.mrf.mxu0
        %v1610 = vadd.f32 0.0, %v1609
        %1611 = vmatmul.f32.gmra.mxu0 %v361
        %v1612 = vpop.f32.mrf.mxu0
        %v1613 = vadd.f32 0.0, %v1612
        %1614 = vmatmul.f32.gmra.mxu0 %v670
        %v1615 = vpop.f32.mrf.mxu0
        %v1616 = vadd.f32 0.0, %v1615
        %1617 = vdwg.mxu0
        %1618 = vmatpush.msra.mxu0 %v1590
        %1619 = vmatpush.msra.mxu0 %v1588
        %1620 = vmatpush.msra.mxu0 %v1586
        %1621 = vmatpush.msra.mxu0 %v1584
        %1622 = vmatpush.msra.mxu0 %v1582
        %1623 = vmatpush.msra.mxu0 %v1580
        %1624 = vmatpush.msra.mxu0 %v1578
        %1625 = vmatpush.msra.mxu0 %v1576
        %1626 = vmatpush.msra.mxu0 %v1574
        %1627 = vmatpush.msra.mxu0 %v1572
        %1628 = vmatpush.msra.mxu0 %v1570
        %1629 = vmatpush.msra.mxu0 %v1568
        %1630 = vmatpush.msra.mxu0 %v1566
        %1631 = vmatpush.msra.mxu0 %v1564
        %1632 = vmatpush.msra.mxu0 %v1562
        %1633 = vmatpush.msra.mxu0 %v1560
        %1634 = vmatmul.f32.gmra.mxu0 %v360
        %v1635 = vpop.f32.mrf.mxu0
        %v1636 = vadd.f32 %v1610, %v1635
        %1637 = vmatmul.f32.gmra.mxu0 %v362
        %v1638 = vpop.f32.mrf.mxu0
        %v1639 = vadd.f32 %v1613, %v1638
        %1640 = vmatmul.f32.gmra.mxu0 %v682
        %v1641 = vpop.f32.mrf.mxu0
        %v1642 = vadd.f32 %v1616, %v1641
        %1643 = vdwg.mxu0
        %1644 = vmatpush.msra.mxu0 %v1559
        %1645 = vmatpush.msra.mxu0 %v1557
        %1646 = vmatpush.msra.mxu0 %v1555
        %1647 = vmatpush.msra.mxu0 %v1553
        %1648 = vmatpush.msra.mxu0 %v1551
        %1649 = vmatpush.msra.mxu0 %v1549
        %1650 = vmatpush.msra.mxu0 %v1547
        %1651 = vmatpush.msra.mxu0 %v1545
        %1652 = vmatpush.msra.mxu0 %v1543
        %1653 = vmatpush.msra.mxu0 %v1541
        %1654 = vmatpush.msra.mxu0 %v1539
        %1655 = vmatpush.msra.mxu0 %v1537
        %1656 = vmatpush.msra.mxu0 %v1535
        %1657 = vmatpush.msra.mxu0 %v1533
        %1658 = vmatpush.msra.mxu0 %v1531
        %1659 = vmatpush.msra.mxu0 %v1529
        %1660 = vmatmul.f32.gmra.mxu0 %v359
        %v1661 = vpop.f32.mrf.mxu0
        %v1662 = vadd.f32 0.0, %v1661
        %1663 = vmatmul.f32.gmra.mxu0 %v361
        %v1664 = vpop.f32.mrf.mxu0
        %v1665 = vadd.f32 0.0, %v1664
        %1666 = vmatmul.f32.gmra.mxu0 %v670
        %v1667 = vpop.f32.mrf.mxu0
        %v1668 = vadd.f32 0.0, %v1667
        %1669 = vdwg.mxu0
        %1670 = vmatpush.msra.mxu0 %v1591
        %1671 = vmatpush.msra.mxu0 %v1589
        %1672 = vmatpush.msra.mxu0 %v1587
        %1673 = vmatpush.msra.mxu0 %v1585
        %1674 = vmatpush.msra.mxu0 %v1583
        %1675 = vmatpush.msra.mxu0 %v1581
        %1676 = vmatpush.msra.mxu0 %v1579
        %1677 = vmatpush.msra.mxu0 %v1577
        %1678 = vmatpush.msra.mxu0 %v1575
        %1679 = vmatpush.msra.mxu0 %v1573
        %1680 = vmatpush.msra.mxu0 %v1571
        %1681 = vmatpush.msra.mxu0 %v1569
        %1682 = vmatpush.msra.mxu0 %v1567
        %1683 = vmatpush.msra.mxu0 %v1565
        %1684 = vmatpush.msra.mxu0 %v1563
        %1685 = vmatpush.msra.mxu0 %v1561
        %1686 = vmatmul.f32.gmra.mxu0 %v360
        %v1687 = vpop.f32.mrf.mxu0
        %v1688 = vadd.f32 %v1662, %v1687
        %1689 = vmatmul.f32.gmra.mxu0 %v362
        %v1690 = vpop.f32.mrf.mxu0
        %v1691 = vadd.f32 %v1665, %v1690
        %1692 = vmatmul.f32.gmra.mxu0 %v682
        %v1693 = vpop.f32.mrf.mxu0
        %v1694 = vadd.f32 %v1668, %v1693
        %1695 = vdwg.mxu0
        %s1696 = scalar_lea.vmem [#allocation8], 3072
        %v1697 = vld [vmem:[%s1696] sm:$0xff]
        %v1698 = vld [vmem:[%s1696 + $0x8] sm:$0xff]
        %v1699 = vld [vmem:[%s1696 + $0x10] sm:$0xff]
        %v1700 = vld [vmem:[%s1696 + $0x18] sm:$0xff]
        %v1701 = vld [vmem:[%s1696 + $0x20] sm:$0xff]
        %v1702 = vld [vmem:[%s1696 + $0x28] sm:$0xff]
        %v1703 = vld [vmem:[%s1696 + $0x30] sm:$0xff]
        %v1704 = vld [vmem:[%s1696 + $0x38] sm:$0xff]
        %v1705 = vld [vmem:[%s1696 + $0x40] sm:$0xff]
        %v1706 = vld [vmem:[%s1696 + $0x48] sm:$0xff]
        %v1707 = vld [vmem:[%s1696 + $0x50] sm:$0xff]
        %v1708 = vld [vmem:[%s1696 + $0x58] sm:$0xff]
        %v1709 = vld [vmem:[%s1696 + $0x60] sm:$0xff]
        %v1710 = vld [vmem:[%s1696 + $0x68] sm:$0xff]
        %v1711 = vld [vmem:[%s1696 + $0x70] sm:$0xff]
        %v1712 = vld [vmem:[%s1696 + $0x78] sm:$0xff]
        %v1713 = vld [vmem:[%s1696 + $0x80] sm:$0xff]
        %v1714 = vld [vmem:[%s1696 + $0x88] sm:$0xff]
        %v1715 = vld [vmem:[%s1696 + $0x90] sm:$0xff]
        %v1716 = vld [vmem:[%s1696 + $0x98] sm:$0xff]
        %v1717 = vld [vmem:[%s1696 + $0xa0] sm:$0xff]
        %v1718 = vld [vmem:[%s1696 + $0xa8] sm:$0xff]
        %v1719 = vld [vmem:[%s1696 + $0xb0] sm:$0xff]
        %v1720 = vld [vmem:[%s1696 + $0xb8] sm:$0xff]
        %v1721 = vld [vmem:[%s1696 + $0xc0] sm:$0xff]
        %v1722 = vld [vmem:[%s1696 + $0xc8] sm:$0xff]
        %v1723 = vld [vmem:[%s1696 + $0xd0] sm:$0xff]
        %v1724 = vld [vmem:[%s1696 + $0xd8] sm:$0xff]
        %v1725 = vld [vmem:[%s1696 + $0xe0] sm:$0xff]
        %v1726 = vld [vmem:[%s1696 + $0xe8] sm:$0xff]
        %v1727 = vld [vmem:[%s1696 + $0xf0] sm:$0xff]
        %v1728 = vld [vmem:[%s1696 + $0xf8] sm:$0xff]
        %v1729 = vld [vmem:[%s1696 + $0x100] sm:$0xff]
        %v1730 = vld [vmem:[%s1696 + $0x108] sm:$0xff]
        %v1731 = vld [vmem:[%s1696 + $0x110] sm:$0xff]
        %v1732 = vld [vmem:[%s1696 + $0x118] sm:$0xff]
        %v1733 = vld [vmem:[%s1696 + $0x120] sm:$0xff]
        %v1734 = vld [vmem:[%s1696 + $0x128] sm:$0xff]
        %v1735 = vld [vmem:[%s1696 + $0x130] sm:$0xff]
        %v1736 = vld [vmem:[%s1696 + $0x138] sm:$0xff]
        %v1737 = vld [vmem:[%s1696 + $0x140] sm:$0xff]
        %v1738 = vld [vmem:[%s1696 + $0x148] sm:$0xff]
        %v1739 = vld [vmem:[%s1696 + $0x150] sm:$0xff]
        %v1740 = vld [vmem:[%s1696 + $0x158] sm:$0xff]
        %v1741 = vld [vmem:[%s1696 + $0x160] sm:$0xff]
        %v1742 = vld [vmem:[%s1696 + $0x168] sm:$0xff]
        %v1743 = vld [vmem:[%s1696 + $0x170] sm:$0xff]
        %v1744 = vld [vmem:[%s1696 + $0x178] sm:$0xff]
        %v1745 = vld [vmem:[%s1696 + $0x180] sm:$0xff]
        %v1746 = vld [vmem:[%s1696 + $0x188] sm:$0xff]
        %v1747 = vld [vmem:[%s1696 + $0x190] sm:$0xff]
        %v1748 = vld [vmem:[%s1696 + $0x198] sm:$0xff]
        %v1749 = vld [vmem:[%s1696 + $0x1a0] sm:$0xff]
        %v1750 = vld [vmem:[%s1696 + $0x1a8] sm:$0xff]
        %v1751 = vld [vmem:[%s1696 + $0x1b0] sm:$0xff]
        %v1752 = vld [vmem:[%s1696 + $0x1b8] sm:$0xff]
        %v1753 = vld [vmem:[%s1696 + $0x1c0] sm:$0xff]
        %v1754 = vld [vmem:[%s1696 + $0x1c8] sm:$0xff]
        %v1755 = vld [vmem:[%s1696 + $0x1d0] sm:$0xff]
        %v1756 = vld [vmem:[%s1696 + $0x1d8] sm:$0xff]
        %v1757 = vld [vmem:[%s1696 + $0x1e0] sm:$0xff]
        %v1758 = vld [vmem:[%s1696 + $0x1e8] sm:$0xff]
        %v1759 = vld [vmem:[%s1696 + $0x1f0] sm:$0xff]
        %v1760 = vld [vmem:[%s1696 + $0x1f8] sm:$0xff]
        %1761 = vmatpush.msra.mxu0 %v1727
        %1762 = vmatpush.msra.mxu0 %v1725
        %1763 = vmatpush.msra.mxu0 %v1723
        %1764 = vmatpush.msra.mxu0 %v1721
        %1765 = vmatpush.msra.mxu0 %v1719
        %1766 = vmatpush.msra.mxu0 %v1717
        %1767 = vmatpush.msra.mxu0 %v1715
        %1768 = vmatpush.msra.mxu0 %v1713
        %1769 = vmatpush.msra.mxu0 %v1711
        %1770 = vmatpush.msra.mxu0 %v1709
        %1771 = vmatpush.msra.mxu0 %v1707
        %1772 = vmatpush.msra.mxu0 %v1705
        %1773 = vmatpush.msra.mxu0 %v1703
        %1774 = vmatpush.msra.mxu0 %v1701
        %1775 = vmatpush.msra.mxu0 %v1699
        %1776 = vmatpush.msra.mxu0 %v1697
        %1777 = vmatmul.f32.gmra.mxu0 %v359
        %v1778 = vpop.f32.mrf.mxu0
        %v1779 = vadd.f32 0.0, %v1778
        %1780 = vmatmul.f32.gmra.mxu0 %v361
        %v1781 = vpop.f32.mrf.mxu0
        %v1782 = vadd.f32 0.0, %v1781
        %1783 = vmatmul.f32.gmra.mxu0 %v670
        %v1784 = vpop.f32.mrf.mxu0
        %v1785 = vadd.f32 0.0, %v1784
        %1786 = vdwg.mxu0
        %1787 = vmatpush.msra.mxu0 %v1759
        %1788 = vmatpush.msra.mxu0 %v1757
        %1789 = vmatpush.msra.mxu0 %v1755
        %1790 = vmatpush.msra.mxu0 %v1753
        %1791 = vmatpush.msra.mxu0 %v1751
        %1792 = vmatpush.msra.mxu0 %v1749
        %1793 = vmatpush.msra.mxu0 %v1747
        %1794 = vmatpush.msra.mxu0 %v1745
        %1795 = vmatpush.msra.mxu0 %v1743
        %1796 = vmatpush.msra.mxu0 %v1741
        %1797 = vmatpush.msra.mxu0 %v1739
        %1798 = vmatpush.msra.mxu0 %v1737
        %1799 = vmatpush.msra.mxu0 %v1735
        %1800 = vmatpush.msra.mxu0 %v1733
        %1801 = vmatpush.msra.mxu0 %v1731
        %1802 = vmatpush.msra.mxu0 %v1729
        %1803 = vmatmul.f32.gmra.mxu0 %v360
        %v1804 = vpop.f32.mrf.mxu0
        %v1805 = vadd.f32 %v1779, %v1804
        %1806 = vmatmul.f32.gmra.mxu0 %v362
        %v1807 = vpop.f32.mrf.mxu0
        %v1808 = vadd.f32 %v1782, %v1807
        %1809 = vmatmul.f32.gmra.mxu0 %v682
        %v1810 = vpop.f32.mrf.mxu0
        %v1811 = vadd.f32 %v1785, %v1810
        %1812 = vdwg.mxu0
        %1813 = vmatpush.msra.mxu0 %v1728
        %1814 = vmatpush.msra.mxu0 %v1726
        %1815 = vmatpush.msra.mxu0 %v1724
        %1816 = vmatpush.msra.mxu0 %v1722
        %1817 = vmatpush.msra.mxu0 %v1720
        %1818 = vmatpush.msra.mxu0 %v1718
        %1819 = vmatpush.msra.mxu0 %v1716
        %1820 = vmatpush.msra.mxu0 %v1714
        %1821 = vmatpush.msra.mxu0 %v1712
        %1822 = vmatpush.msra.mxu0 %v1710
        %1823 = vmatpush.msra.mxu0 %v1708
        %1824 = vmatpush.msra.mxu0 %v1706
        %1825 = vmatpush.msra.mxu0 %v1704
        %1826 = vmatpush.msra.mxu0 %v1702
        %1827 = vmatpush.msra.mxu0 %v1700
        %1828 = vmatpush.msra.mxu0 %v1698
        %1829 = vmatmul.f32.gmra.mxu0 %v359
        %v1830 = vpop.f32.mrf.mxu0
        %v1831 = vadd.f32 0.0, %v1830
        %1832 = vmatmul.f32.gmra.mxu0 %v361
        %v1833 = vpop.f32.mrf.mxu0
        %v1834 = vadd.f32 0.0, %v1833
        %1835 = vmatmul.f32.gmra.mxu0 %v670
        %v1836 = vpop.f32.mrf.mxu0
        %v1837 = vadd.f32 0.0, %v1836
        %1838 = vdwg.mxu0
        %1839 = vmatpush.msra.mxu0 %v1760
        %1840 = vmatpush.msra.mxu0 %v1758
        %1841 = vmatpush.msra.mxu0 %v1756
        %1842 = vmatpush.msra.mxu0 %v1754
        %1843 = vmatpush.msra.mxu0 %v1752
        %1844 = vmatpush.msra.mxu0 %v1750
        %1845 = vmatpush.msra.mxu0 %v1748
        %1846 = vmatpush.msra.mxu0 %v1746
        %1847 = vmatpush.msra.mxu0 %v1744
        %1848 = vmatpush.msra.mxu0 %v1742
        %1849 = vmatpush.msra.mxu0 %v1740
        %1850 = vmatpush.msra.mxu0 %v1738
        %1851 = vmatpush.msra.mxu0 %v1736
        %1852 = vmatpush.msra.mxu0 %v1734
        %1853 = vmatpush.msra.mxu0 %v1732
        %1854 = vmatpush.msra.mxu0 %v1730
        %1855 = vmatmul.f32.gmra.mxu0 %v360
        %v1856 = vpop.f32.mrf.mxu0
        %v1857 = vadd.f32 %v1831, %v1856
        %1858 = vmatmul.f32.gmra.mxu0 %v362
        %v1859 = vpop.f32.mrf.mxu0
        %v1860 = vadd.f32 %v1834, %v1859
        %1861 = vmatmul.f32.gmra.mxu0 %v682
        %v1862 = vpop.f32.mrf.mxu0
        %v1863 = vadd.f32 %v1837, %v1862
        %1864 = vdwg.mxu0
        %s1865 = scalar_lea.vmem [#allocation8], 3584
        %v1866 = vld [vmem:[%s1865] sm:$0xff]
        %v1867 = vld [vmem:[%s1865 + $0x8] sm:$0xff]
        %v1868 = vld [vmem:[%s1865 + $0x10] sm:$0xff]
        %v1869 = vld [vmem:[%s1865 + $0x18] sm:$0xff]
        %v1870 = vld [vmem:[%s1865 + $0x20] sm:$0xff]
        %v1871 = vld [vmem:[%s1865 + $0x28] sm:$0xff]
        %v1872 = vld [vmem:[%s1865 + $0x30] sm:$0xff]
        %v1873 = vld [vmem:[%s1865 + $0x38] sm:$0xff]
        %v1874 = vld [vmem:[%s1865 + $0x40] sm:$0xff]
        %v1875 = vld [vmem:[%s1865 + $0x48] sm:$0xff]
        %v1876 = vld [vmem:[%s1865 + $0x50] sm:$0xff]
        %v1877 = vld [vmem:[%s1865 + $0x58] sm:$0xff]
        %v1878 = vld [vmem:[%s1865 + $0x60] sm:$0xff]
        %v1879 = vld [vmem:[%s1865 + $0x68] sm:$0xff]
        %v1880 = vld [vmem:[%s1865 + $0x70] sm:$0xff]
        %v1881 = vld [vmem:[%s1865 + $0x78] sm:$0xff]
        %v1882 = vld [vmem:[%s1865 + $0x80] sm:$0xff]
        %v1883 = vld [vmem:[%s1865 + $0x88] sm:$0xff]
        %v1884 = vld [vmem:[%s1865 + $0x90] sm:$0xff]
        %v1885 = vld [vmem:[%s1865 + $0x98] sm:$0xff]
        %v1886 = vld [vmem:[%s1865 + $0xa0] sm:$0xff]
        %v1887 = vld [vmem:[%s1865 + $0xa8] sm:$0xff]
        %v1888 = vld [vmem:[%s1865 + $0xb0] sm:$0xff]
        %v1889 = vld [vmem:[%s1865 + $0xb8] sm:$0xff]
        %v1890 = vld [vmem:[%s1865 + $0xc0] sm:$0xff]
        %v1891 = vld [vmem:[%s1865 + $0xc8] sm:$0xff]
        %v1892 = vld [vmem:[%s1865 + $0xd0] sm:$0xff]
        %v1893 = vld [vmem:[%s1865 + $0xd8] sm:$0xff]
        %v1894 = vld [vmem:[%s1865 + $0xe0] sm:$0xff]
        %v1895 = vld [vmem:[%s1865 + $0xe8] sm:$0xff]
        %v1896 = vld [vmem:[%s1865 + $0xf0] sm:$0xff]
        %v1897 = vld [vmem:[%s1865 + $0xf8] sm:$0xff]
        %v1898 = vld [vmem:[%s1865 + $0x100] sm:$0xff]
        %v1899 = vld [vmem:[%s1865 + $0x108] sm:$0xff]
        %v1900 = vld [vmem:[%s1865 + $0x110] sm:$0xff]
        %v1901 = vld [vmem:[%s1865 + $0x118] sm:$0xff]
        %v1902 = vld [vmem:[%s1865 + $0x120] sm:$0xff]
        %v1903 = vld [vmem:[%s1865 + $0x128] sm:$0xff]
        %v1904 = vld [vmem:[%s1865 + $0x130] sm:$0xff]
        %v1905 = vld [vmem:[%s1865 + $0x138] sm:$0xff]
        %v1906 = vld [vmem:[%s1865 + $0x140] sm:$0xff]
        %v1907 = vld [vmem:[%s1865 + $0x148] sm:$0xff]
        %v1908 = vld [vmem:[%s1865 + $0x150] sm:$0xff]
        %v1909 = vld [vmem:[%s1865 + $0x158] sm:$0xff]
        %v1910 = vld [vmem:[%s1865 + $0x160] sm:$0xff]
        %v1911 = vld [vmem:[%s1865 + $0x168] sm:$0xff]
        %v1912 = vld [vmem:[%s1865 + $0x170] sm:$0xff]
        %v1913 = vld [vmem:[%s1865 + $0x178] sm:$0xff]
        %v1914 = vld [vmem:[%s1865 + $0x180] sm:$0xff]
        %v1915 = vld [vmem:[%s1865 + $0x188] sm:$0xff]
        %v1916 = vld [vmem:[%s1865 + $0x190] sm:$0xff]
        %v1917 = vld [vmem:[%s1865 + $0x198] sm:$0xff]
        %v1918 = vld [vmem:[%s1865 + $0x1a0] sm:$0xff]
        %v1919 = vld [vmem:[%s1865 + $0x1a8] sm:$0xff]
        %v1920 = vld [vmem:[%s1865 + $0x1b0] sm:$0xff]
        %v1921 = vld [vmem:[%s1865 + $0x1b8] sm:$0xff]
        %v1922 = vld [vmem:[%s1865 + $0x1c0] sm:$0xff]
        %v1923 = vld [vmem:[%s1865 + $0x1c8] sm:$0xff]
        %v1924 = vld [vmem:[%s1865 + $0x1d0] sm:$0xff]
        %v1925 = vld [vmem:[%s1865 + $0x1d8] sm:$0xff]
        %v1926 = vld [vmem:[%s1865 + $0x1e0] sm:$0xff]
        %v1927 = vld [vmem:[%s1865 + $0x1e8] sm:$0xff]
        %v1928 = vld [vmem:[%s1865 + $0x1f0] sm:$0xff]
        %v1929 = vld [vmem:[%s1865 + $0x1f8] sm:$0xff]
        %1930 = vmatpush.msra.mxu0 %v1896
        %1931 = vmatpush.msra.mxu0 %v1894
        %1932 = vmatpush.msra.mxu0 %v1892
        %1933 = vmatpush.msra.mxu0 %v1890
        %1934 = vmatpush.msra.mxu0 %v1888
        %1935 = vmatpush.msra.mxu0 %v1886
        %1936 = vmatpush.msra.mxu0 %v1884
        %1937 = vmatpush.msra.mxu0 %v1882
        %1938 = vmatpush.msra.mxu0 %v1880
        %1939 = vmatpush.msra.mxu0 %v1878
        %1940 = vmatpush.msra.mxu0 %v1876
        %1941 = vmatpush.msra.mxu0 %v1874
        %1942 = vmatpush.msra.mxu0 %v1872
        %1943 = vmatpush.msra.mxu0 %v1870
        %1944 = vmatpush.msra.mxu0 %v1868
        %1945 = vmatpush.msra.mxu0 %v1866
        %1946 = vmatmul.f32.gmra.mxu0 %v359
        %v1947 = vpop.f32.mrf.mxu0
        %v1948 = vadd.f32 0.0, %v1947
        %1949 = vmatmul.f32.gmra.mxu0 %v361
        %v1950 = vpop.f32.mrf.mxu0
        %v1951 = vadd.f32 0.0, %v1950
        %1952 = vmatmul.f32.gmra.mxu0 %v670
        %v1953 = vpop.f32.mrf.mxu0
        %v1954 = vadd.f32 0.0, %v1953
        %1955 = vdwg.mxu0
        %1956 = vmatpush.msra.mxu0 %v1928
        %1957 = vmatpush.msra.mxu0 %v1926
        %1958 = vmatpush.msra.mxu0 %v1924
        %1959 = vmatpush.msra.mxu0 %v1922
        %1960 = vmatpush.msra.mxu0 %v1920
        %1961 = vmatpush.msra.mxu0 %v1918
        %1962 = vmatpush.msra.mxu0 %v1916
        %1963 = vmatpush.msra.mxu0 %v1914
        %1964 = vmatpush.msra.mxu0 %v1912
        %1965 = vmatpush.msra.mxu0 %v1910
        %1966 = vmatpush.msra.mxu0 %v1908
        %1967 = vmatpush.msra.mxu0 %v1906
        %1968 = vmatpush.msra.mxu0 %v1904
        %1969 = vmatpush.msra.mxu0 %v1902
        %1970 = vmatpush.msra.mxu0 %v1900
        %1971 = vmatpush.msra.mxu0 %v1898
        %1972 = vmatmul.f32.gmra.mxu0 %v360
        %v1973 = vpop.f32.mrf.mxu0
        %v1974 = vadd.f32 %v1948, %v1973
        %1975 = vmatmul.f32.gmra.mxu0 %v362
        %v1976 = vpop.f32.mrf.mxu0
        %v1977 = vadd.f32 %v1951, %v1976
        %1978 = vmatmul.f32.gmra.mxu0 %v682
        %v1979 = vpop.f32.mrf.mxu0
        %v1980 = vadd.f32 %v1954, %v1979
        %1981 = vdwg.mxu0
        %1982 = vmatpush.msra.mxu0 %v1897
        %1983 = vmatpush.msra.mxu0 %v1895
        %1984 = vmatpush.msra.mxu0 %v1893
        %1985 = vmatpush.msra.mxu0 %v1891
        %1986 = vmatpush.msra.mxu0 %v1889
        %1987 = vmatpush.msra.mxu0 %v1887
        %1988 = vmatpush.msra.mxu0 %v1885
        %1989 = vmatpush.msra.mxu0 %v1883
        %1990 = vmatpush.msra.mxu0 %v1881
        %1991 = vmatpush.msra.mxu0 %v1879
        %1992 = vmatpush.msra.mxu0 %v1877
        %1993 = vmatpush.msra.mxu0 %v1875
        %1994 = vmatpush.msra.mxu0 %v1873
        %1995 = vmatpush.msra.mxu0 %v1871
        %1996 = vmatpush.msra.mxu0 %v1869
        %1997 = vmatpush.msra.mxu0 %v1867
        %1998 = vmatmul.f32.gmra.mxu0 %v359
        %v1999 = vpop.f32.mrf.mxu0
        %v2000 = vadd.f32 0.0, %v1999
        %2001 = vmatmul.f32.gmra.mxu0 %v361
        %v2002 = vpop.f32.mrf.mxu0
        %v2003 = vadd.f32 0.0, %v2002
        %2004 = vmatmul.f32.gmra.mxu0 %v670
        %v2005 = vpop.f32.mrf.mxu0
        %v2006 = vadd.f32 0.0, %v2005
        %2007 = vdwg.mxu0
        %2008 = vmatpush.msra.mxu0 %v1929
        %2009 = vmatpush.msra.mxu0 %v1927
        %2010 = vmatpush.msra.mxu0 %v1925
        %2011 = vmatpush.msra.mxu0 %v1923
        %2012 = vmatpush.msra.mxu0 %v1921
        %2013 = vmatpush.msra.mxu0 %v1919
        %2014 = vmatpush.msra.mxu0 %v1917
        %2015 = vmatpush.msra.mxu0 %v1915
        %2016 = vmatpush.msra.mxu0 %v1913
        %2017 = vmatpush.msra.mxu0 %v1911
        %2018 = vmatpush.msra.mxu0 %v1909
        %2019 = vmatpush.msra.mxu0 %v1907
        %2020 = vmatpush.msra.mxu0 %v1905
        %2021 = vmatpush.msra.mxu0 %v1903
        %2022 = vmatpush.msra.mxu0 %v1901
        %2023 = vmatpush.msra.mxu0 %v1899
        %2024 = vmatmul.f32.gmra.mxu0 %v360
        %v2025 = vpop.f32.mrf.mxu0
        %v2026 = vadd.f32 %v2000, %v2025
        %2027 = vmatmul.f32.gmra.mxu0 %v362
        %v2028 = vpop.f32.mrf.mxu0
        %v2029 = vadd.f32 %v2003, %v2028
        %2030 = vmatmul.f32.gmra.mxu0 %v682
        %v2031 = vpop.f32.mrf.mxu0
        %v2032 = vadd.f32 %v2006, %v2031
        %2033 = vdwg.mxu0
        %s2034 = scalar_lea.vmem [#allocation8], 4096
        %v2035 = vld [vmem:[%s2034] sm:$0xff]
        %v2036 = vld [vmem:[%s2034 + $0x8] sm:$0xff]
        %v2037 = vld [vmem:[%s2034 + $0x10] sm:$0xff]
        %v2038 = vld [vmem:[%s2034 + $0x18] sm:$0xff]
        %v2039 = vld [vmem:[%s2034 + $0x20] sm:$0xff]
        %v2040 = vld [vmem:[%s2034 + $0x28] sm:$0xff]
        %v2041 = vld [vmem:[%s2034 + $0x30] sm:$0xff]
        %v2042 = vld [vmem:[%s2034 + $0x38] sm:$0xff]
        %v2043 = vld [vmem:[%s2034 + $0x40] sm:$0xff]
        %v2044 = vld [vmem:[%s2034 + $0x48] sm:$0xff]
        %v2045 = vld [vmem:[%s2034 + $0x50] sm:$0xff]
        %v2046 = vld [vmem:[%s2034 + $0x58] sm:$0xff]
        %v2047 = vld [vmem:[%s2034 + $0x60] sm:$0xff]
        %v2048 = vld [vmem:[%s2034 + $0x68] sm:$0xff]
        %v2049 = vld [vmem:[%s2034 + $0x70] sm:$0xff]
        %v2050 = vld [vmem:[%s2034 + $0x78] sm:$0xff]
        %v2051 = vld [vmem:[%s2034 + $0x80] sm:$0xff]
        %v2052 = vld [vmem:[%s2034 + $0x88] sm:$0xff]
        %v2053 = vld [vmem:[%s2034 + $0x90] sm:$0xff]
        %v2054 = vld [vmem:[%s2034 + $0x98] sm:$0xff]
        %v2055 = vld [vmem:[%s2034 + $0xa0] sm:$0xff]
        %v2056 = vld [vmem:[%s2034 + $0xa8] sm:$0xff]
        %v2057 = vld [vmem:[%s2034 + $0xb0] sm:$0xff]
        %v2058 = vld [vmem:[%s2034 + $0xb8] sm:$0xff]
        %v2059 = vld [vmem:[%s2034 + $0xc0] sm:$0xff]
        %v2060 = vld [vmem:[%s2034 + $0xc8] sm:$0xff]
        %v2061 = vld [vmem:[%s2034 + $0xd0] sm:$0xff]
        %v2062 = vld [vmem:[%s2034 + $0xd8] sm:$0xff]
        %v2063 = vld [vmem:[%s2034 + $0xe0] sm:$0xff]
        %v2064 = vld [vmem:[%s2034 + $0xe8] sm:$0xff]
        %v2065 = vld [vmem:[%s2034 + $0xf0] sm:$0xff]
        %v2066 = vld [vmem:[%s2034 + $0xf8] sm:$0xff]
        %v2067 = vld [vmem:[%s2034 + $0x100] sm:$0xff]
        %v2068 = vld [vmem:[%s2034 + $0x108] sm:$0xff]
        %v2069 = vld [vmem:[%s2034 + $0x110] sm:$0xff]
        %v2070 = vld [vmem:[%s2034 + $0x118] sm:$0xff]
        %v2071 = vld [vmem:[%s2034 + $0x120] sm:$0xff]
        %v2072 = vld [vmem:[%s2034 + $0x128] sm:$0xff]
        %v2073 = vld [vmem:[%s2034 + $0x130] sm:$0xff]
        %v2074 = vld [vmem:[%s2034 + $0x138] sm:$0xff]
        %v2075 = vld [vmem:[%s2034 + $0x140] sm:$0xff]
        %v2076 = vld [vmem:[%s2034 + $0x148] sm:$0xff]
        %v2077 = vld [vmem:[%s2034 + $0x150] sm:$0xff]
        %v2078 = vld [vmem:[%s2034 + $0x158] sm:$0xff]
        %v2079 = vld [vmem:[%s2034 + $0x160] sm:$0xff]
        %v2080 = vld [vmem:[%s2034 + $0x168] sm:$0xff]
        %v2081 = vld [vmem:[%s2034 + $0x170] sm:$0xff]
        %v2082 = vld [vmem:[%s2034 + $0x178] sm:$0xff]
        %v2083 = vld [vmem:[%s2034 + $0x180] sm:$0xff]
        %v2084 = vld [vmem:[%s2034 + $0x188] sm:$0xff]
        %v2085 = vld [vmem:[%s2034 + $0x190] sm:$0xff]
        %v2086 = vld [vmem:[%s2034 + $0x198] sm:$0xff]
        %v2087 = vld [vmem:[%s2034 + $0x1a0] sm:$0xff]
        %v2088 = vld [vmem:[%s2034 + $0x1a8] sm:$0xff]
        %v2089 = vld [vmem:[%s2034 + $0x1b0] sm:$0xff]
        %v2090 = vld [vmem:[%s2034 + $0x1b8] sm:$0xff]
        %v2091 = vld [vmem:[%s2034 + $0x1c0] sm:$0xff]
        %v2092 = vld [vmem:[%s2034 + $0x1c8] sm:$0xff]
        %v2093 = vld [vmem:[%s2034 + $0x1d0] sm:$0xff]
        %v2094 = vld [vmem:[%s2034 + $0x1d8] sm:$0xff]
        %v2095 = vld [vmem:[%s2034 + $0x1e0] sm:$0xff]
        %v2096 = vld [vmem:[%s2034 + $0x1e8] sm:$0xff]
        %v2097 = vld [vmem:[%s2034 + $0x1f0] sm:$0xff]
        %v2098 = vld [vmem:[%s2034 + $0x1f8] sm:$0xff]
        %2099 = vmatpush.msra.mxu0 %v2065
        %2100 = vmatpush.msra.mxu0 %v2063
        %2101 = vmatpush.msra.mxu0 %v2061
        %2102 = vmatpush.msra.mxu0 %v2059
        %2103 = vmatpush.msra.mxu0 %v2057
        %2104 = vmatpush.msra.mxu0 %v2055
        %2105 = vmatpush.msra.mxu0 %v2053
        %2106 = vmatpush.msra.mxu0 %v2051
        %2107 = vmatpush.msra.mxu0 %v2049
        %2108 = vmatpush.msra.mxu0 %v2047
        %2109 = vmatpush.msra.mxu0 %v2045
        %2110 = vmatpush.msra.mxu0 %v2043
        %2111 = vmatpush.msra.mxu0 %v2041
        %2112 = vmatpush.msra.mxu0 %v2039
        %2113 = vmatpush.msra.mxu0 %v2037
        %2114 = vmatpush.msra.mxu0 %v2035
        %2115 = vmatmul.f32.gmra.mxu0 %v359
        %v2116 = vpop.f32.mrf.mxu0
        %v2117 = vadd.f32 0.0, %v2116
        %2118 = vmatmul.f32.gmra.mxu0 %v361
        %v2119 = vpop.f32.mrf.mxu0
        %v2120 = vadd.f32 0.0, %v2119
        %2121 = vmatmul.f32.gmra.mxu0 %v670
        %v2122 = vpop.f32.mrf.mxu0
        %v2123 = vadd.f32 0.0, %v2122
        %2124 = vdwg.mxu0
        %2125 = vmatpush.msra.mxu0 %v2097
        %2126 = vmatpush.msra.mxu0 %v2095
        %2127 = vmatpush.msra.mxu0 %v2093
        %2128 = vmatpush.msra.mxu0 %v2091
        %2129 = vmatpush.msra.mxu0 %v2089
        %2130 = vmatpush.msra.mxu0 %v2087
        %2131 = vmatpush.msra.mxu0 %v2085
        %2132 = vmatpush.msra.mxu0 %v2083
        %2133 = vmatpush.msra.mxu0 %v2081
        %2134 = vmatpush.msra.mxu0 %v2079
        %2135 = vmatpush.msra.mxu0 %v2077
        %2136 = vmatpush.msra.mxu0 %v2075
        %2137 = vmatpush.msra.mxu0 %v2073
        %2138 = vmatpush.msra.mxu0 %v2071
        %2139 = vmatpush.msra.mxu0 %v2069
        %2140 = vmatpush.msra.mxu0 %v2067
        %2141 = vmatmul.f32.gmra.mxu0 %v360
        %v2142 = vpop.f32.mrf.mxu0
        %v2143 = vadd.f32 %v2117, %v2142
        %2144 = vmatmul.f32.gmra.mxu0 %v362
        %v2145 = vpop.f32.mrf.mxu0
        %v2146 = vadd.f32 %v2120, %v2145
        %2147 = vmatmul.f32.gmra.mxu0 %v682
        %v2148 = vpop.f32.mrf.mxu0
        %v2149 = vadd.f32 %v2123, %v2148
        %2150 = vdwg.mxu0
        %2151 = vmatpush.msra.mxu0 %v2066
        %2152 = vmatpush.msra.mxu0 %v2064
        %2153 = vmatpush.msra.mxu0 %v2062
        %2154 = vmatpush.msra.mxu0 %v2060
        %2155 = vmatpush.msra.mxu0 %v2058
        %2156 = vmatpush.msra.mxu0 %v2056
        %2157 = vmatpush.msra.mxu0 %v2054
        %2158 = vmatpush.msra.mxu0 %v2052
        %2159 = vmatpush.msra.mxu0 %v2050
        %2160 = vmatpush.msra.mxu0 %v2048
        %2161 = vmatpush.msra.mxu0 %v2046
        %2162 = vmatpush.msra.mxu0 %v2044
        %2163 = vmatpush.msra.mxu0 %v2042
        %2164 = vmatpush.msra.mxu0 %v2040
        %2165 = vmatpush.msra.mxu0 %v2038
        %2166 = vmatpush.msra.mxu0 %v2036
        %2167 = vmatmul.f32.gmra.mxu0 %v359
        %v2168 = vpop.f32.mrf.mxu0
        %v2169 = vadd.f32 0.0, %v2168
        %2170 = vmatmul.f32.gmra.mxu0 %v361
        %v2171 = vpop.f32.mrf.mxu0
        %v2172 = vadd.f32 0.0, %v2171
        %2173 = vmatmul.f32.gmra.mxu0 %v670
        %v2174 = vpop.f32.mrf.mxu0
        %v2175 = vadd.f32 0.0, %v2174
        %2176 = vdwg.mxu0
        %2177 = vmatpush.msra.mxu0 %v2098
        %2178 = vmatpush.msra.mxu0 %v2096
        %2179 = vmatpush.msra.mxu0 %v2094
        %2180 = vmatpush.msra.mxu0 %v2092
        %2181 = vmatpush.msra.mxu0 %v2090
        %2182 = vmatpush.msra.mxu0 %v2088
        %2183 = vmatpush.msra.mxu0 %v2086
        %2184 = vmatpush.msra.mxu0 %v2084
        %2185 = vmatpush.msra.mxu0 %v2082
        %2186 = vmatpush.msra.mxu0 %v2080
        %2187 = vmatpush.msra.mxu0 %v2078
        %2188 = vmatpush.msra.mxu0 %v2076
        %2189 = vmatpush.msra.mxu0 %v2074
        %2190 = vmatpush.msra.mxu0 %v2072
        %2191 = vmatpush.msra.mxu0 %v2070
        %2192 = vmatpush.msra.mxu0 %v2068
        %2193 = vmatmul.f32.gmra.mxu0 %v360
        %v2194 = vpop.f32.mrf.mxu0
        %v2195 = vadd.f32 %v2169, %v2194
        %2196 = vmatmul.f32.gmra.mxu0 %v362
        %v2197 = vpop.f32.mrf.mxu0
        %v2198 = vadd.f32 %v2172, %v2197
        %2199 = vmatmul.f32.gmra.mxu0 %v682
        %v2200 = vpop.f32.mrf.mxu0
        %v2201 = vadd.f32 %v2175, %v2200
        %2202 = vdwg.mxu0
        %v2203 = vld [vmem:[#allocation10] sm:$0xff]
        %v2204 = vld [vmem:[#allocation10 + $0x8] sm:$0xff]
        %v2205 = vld [vmem:[#allocation10 + $0x10] sm:$0xff]
        %v2206 = vld [vmem:[#allocation10 + $0x18] sm:$0xff]
        %v2207 = vld [vmem:[#allocation10 + $0x20] sm:$0x1]
        %v2208 = vld [vmem:[#allocation10 + $0x28] sm:$0x1]
        %v2209 = vld [vmem:[%s5] sm:$0xff]
        %v2210 = vld [vmem:[%s5 + $0x8] sm:$0xff]
        %v2211 = vld [vmem:[%s5 + $0x10] sm:$0x1]
        %2213 = vset.pattern.permute.xlu0 0
        %2214 = vperm.xlu0 %2213, %v2209
        %v2215 = vpop.permute.xlu0 %2214
        %2218 = vset.pattern.permute.xlu0 0
        %2219 = vperm.xlu0 %2218, %v2210
        %v2220 = vpop.permute.xlu0 %2219
        %2223 = vset.pattern.permute.xlu0 0
        %2224 = vperm.xlu0 %2223, %v2211
        %v2225 = vpop.permute.xlu0 %2224
        %vm2227 = vcmask 719872
        %v2229 = vsel %vm2227, %v2204, 0
        %v2232 = vsel %vm2227, %v2206, 0
        %v2235 = vsel %vm2227, %v2208, 0
        %2237 = vmatpush.msra.mxu0 %v1636
        %2238 = vmatpush.msra.mxu0 %v1473
        %2239 = vmatpush.msra.mxu0 %v1470
        %2240 = vmatpush.msra.mxu0 %v1467
        %2241 = vmatpush.msra.mxu0 %v1304
        %2242 = vmatpush.msra.mxu0 %v1301
        %2243 = vmatpush.msra.mxu0 %v1298
        %2244 = vmatpush.msra.mxu0 %v1135
        %2245 = vmatpush.msra.mxu0 %v1132
        %2246 = vmatpush.msra.mxu0 %v1129
        %2247 = vmatpush.msra.mxu0 %v966
        %2248 = vmatpush.msra.mxu0 %v963
        %2249 = vmatpush.msra.mxu0 %v960
        %2250 = vmatpush.msra.mxu0 %v797
        %2251 = vmatpush.msra.mxu0 %v794
        %2252 = vmatpush.msra.mxu0 %v791
        %2253 = vmatmul.f32.gmra.mxu0 %v2203
        %v2254 = vpop.f32.mrf.mxu0
        %v2255 = vadd.f32 %v2215, %v2254
        %2256 = vmatmul.f32.gmra.mxu0 %v2205
        %v2257 = vpop.f32.mrf.mxu0
        %v2258 = vadd.f32 %v2220, %v2257
        %2259 = vmatmul.f32.gmra.mxu0 %v2207
        %v2260 = vpop.f32.mrf.mxu0
        %v2261 = vadd.f32 %v2225, %v2260
        %2262 = vdwg.mxu0
        %2263 = vmatpush.msra.mxu0 0.0
        %2264 = vmatpush.msra.mxu0 0.0
        %2265 = vmatpush.msra.mxu0 0.0
        %2266 = vmatpush.msra.mxu0 0.0
        %2267 = vmatpush.msra.mxu0 0.0
        %2268 = vmatpush.msra.mxu0 %v2149
        %2269 = vmatpush.msra.mxu0 %v2146
        %2270 = vmatpush.msra.mxu0 %v2143
        %2271 = vmatpush.msra.mxu0 %v1980
        %2272 = vmatpush.msra.mxu0 %v1977
        %2273 = vmatpush.msra.mxu0 %v1974
        %2274 = vmatpush.msra.mxu0 %v1811
        %2275 = vmatpush.msra.mxu0 %v1808
        %2276 = vmatpush.msra.mxu0 %v1805
        %2277 = vmatpush.msra.mxu0 %v1642
        %2278 = vmatpush.msra.mxu0 %v1639
        %2279 = vmatmul.f32.gmra.mxu0 %v2229
        %v2280 = vpop.f32.mrf.mxu0
        %v2281 = vadd.f32 %v2255, %v2280
        %2282 = vmatmul.f32.gmra.mxu0 %v2232
        %v2283 = vpop.f32.mrf.mxu0
        %v2284 = vadd.f32 %v2258, %v2283
        %2285 = vmatmul.f32.gmra.mxu0 %v2235
        %v2286 = vpop.f32.mrf.mxu0
        %v2287 = vadd.f32 %v2261, %v2286
        %2288 = vdwg.mxu0
        %2289 = vmatpush.msra.mxu0 %v1688
        %2290 = vmatpush.msra.mxu0 %v1525
        %2291 = vmatpush.msra.mxu0 %v1522
        %2292 = vmatpush.msra.mxu0 %v1519
        %2293 = vmatpush.msra.mxu0 %v1356
        %2294 = vmatpush.msra.mxu0 %v1353
        %2295 = vmatpush.msra.mxu0 %v1350
        %2296 = vmatpush.msra.mxu0 %v1187
        %2297 = vmatpush.msra.mxu0 %v1184
        %2298 = vmatpush.msra.mxu0 %v1181
        %2299 = vmatpush.msra.mxu0 %v1018
        %2300 = vmatpush.msra.mxu0 %v1015
        %2301 = vmatpush.msra.mxu0 %v1012
        %2302 = vmatpush.msra.mxu0 %v849
        %2303 = vmatpush.msra.mxu0 %v846
        %2304 = vmatpush.msra.mxu0 %v843
        %2305 = vmatmul.f32.gmra.mxu0 %v2203
        %v2306 = vpop.f32.mrf.mxu0
        %v2307 = vadd.f32 %v2215, %v2306
        %2308 = vmatmul.f32.gmra.mxu0 %v2205
        %v2309 = vpop.f32.mrf.mxu0
        %v2310 = vadd.f32 %v2220, %v2309
        %2311 = vmatmul.f32.gmra.mxu0 %v2207
        %v2312 = vpop.f32.mrf.mxu0
        %v2313 = vadd.f32 %v2225, %v2312
        %2314 = vdwg.mxu0
        %2315 = vmatpush.msra.mxu0 0.0
        %2316 = vmatpush.msra.mxu0 0.0
        %2317 = vmatpush.msra.mxu0 0.0
        %2318 = vmatpush.msra.mxu0 0.0
        %2319 = vmatpush.msra.mxu0 0.0
        %2320 = vmatpush.msra.mxu0 %v2201
        %2321 = vmatpush.msra.mxu0 %v2198
        %2322 = vmatpush.msra.mxu0 %v2195
        %2323 = vmatpush.msra.mxu0 %v2032
        %2324 = vmatpush.msra.mxu0 %v2029
        %2325 = vmatpush.msra.mxu0 %v2026
        %2326 = vmatpush.msra.mxu0 %v1863
        %2327 = vmatpush.msra.mxu0 %v1860
        %2328 = vmatpush.msra.mxu0 %v1857
        %2329 = vmatpush.msra.mxu0 %v1694
        %2330 = vmatpush.msra.mxu0 %v1691
        %2331 = vmatmul.f32.gmra.mxu0 %v2229
        %v2332 = vpop.f32.mrf.mxu0
        %v2333 = vadd.f32 %v2307, %v2332
        %2334 = vmatmul.f32.gmra.mxu0 %v2232
        %v2335 = vpop.f32.mrf.mxu0
        %v2336 = vadd.f32 %v2310, %v2335
        %2337 = vmatmul.f32.gmra.mxu0 %v2235
        %v2338 = vpop.f32.mrf.mxu0
        %v2339 = vadd.f32 %v2313, %v2338
        %2340 = vdwg.mxu0
        %v2341 = vmul.f32 %v2281, %v2284
        %v2342 = vmul.f32 %v2333, %v2336
        %v2343 = vrot.slane %v2341, 4
        %v2344 = vadd.f32 %v2341, %v2343
        %v2345 = vrot.slane %v2344, 2
        %v2346 = vadd.f32 %v2344, %v2345
        %v2347 = vrot.slane %v2346, 1
        %v2348 = vadd.f32 %v2346, %v2347
        %v2349 = vrot.slane %v2342, 4
        %v2350 = vadd.f32 %v2342, %v2349
        %v2351 = vrot.slane %v2350, 2
        %v2352 = vadd.f32 %v2350, %v2351
        %v2353 = vrot.slane %v2352, 1
        %v2354 = vadd.f32 %v2352, %v2353
        %v2355 = vsub.f32 0.0, %v2348
        %v2356 = vsub.f32 0.0, %v2354
        %v2357 = vmul.f32 %v2355, 1.442695
        %v2358 = vpow.pop %v2357
        %v2359 = vmul.f32 %v2356, 1.442695
        %v2360 = vpow.pop %v2359
        %v2361 = vadd.f32 %v2358, 1.0
        %v2362 = vadd.f32 %v2360, 1.0
        %v2363 = vrcp.pop %v2361
        %v2364 = vmul.f32 %v2361, %v2363
        %v2365 = vsub.f32 1.0, %v2364
        %v2366 = vmul.f32 %v2363, %v2365
        %v2367 = vadd.f32 %v2363, %v2366
        %vm2368 = vweird.f32 %v2361
        %vm2369 = vweird.f32 %v2363
        %vm2370 = vmor %vm2368, %vm2369
        %v2371 = vsel %vm2370, %v2363, %v2367
        %v2372 = vand.u32 2147483647, %v2361
        %vm2373 = vcmp.eq.f32.partialorder %v2372, 8.507059e+37
        %v2374 = vand.u32 %v2361, 2147483648
        %v2375 = vor.u32 1.1754944e-38, %v2374
        %v2376 = vsel %vm2373, %v2375, %v2371
        %v2377 = vmul.f32 1.0, %v2376
        %v2378 = vrcp.pop %v2362
        %v2379 = vmul.f32 %v2362, %v2378
        %v2380 = vsub.f32 1.0, %v2379
        %v2381 = vmul.f32 %v2378, %v2380
        %v2382 = vadd.f32 %v2378, %v2381
        %vm2383 = vweird.f32 %v2362
        %vm2384 = vweird.f32 %v2378
        %vm2385 = vmor %vm2383, %vm2384
        %v2386 = vsel %vm2385, %v2378, %v2382
        %v2387 = vand.u32 2147483647, %v2362
        %vm2388 = vcmp.eq.f32.partialorder %v2387, 8.507059e+37
        %v2389 = vand.u32 %v2362, 2147483648
        %v2390 = vor.u32 1.1754944e-38, %v2389
        %v2391 = vsel %vm2388, %v2390, %v2386
        %v2392 = vmul.f32 1.0, %v2391
        %v2393 = vsub.f32 0.0, %v2287
        %v2394 = vsub.f32 0.0, %v2339
        %v2395 = vmul.f32 %v2393, 1.442695
        %v2396 = vpow.pop %v2395
        %v2397 = vmul.f32 %v2394, 1.442695
        %v2398 = vpow.pop %v2397
        %v2399 = vadd.f32 %v2396, 1.0
        %v2400 = vadd.f32 %v2398, 1.0
        %v2401 = vrcp.pop %v2399
        %v2402 = vmul.f32 %v2399, %v2401
        %v2403 = vsub.f32 1.0, %v2402
        %v2404 = vmul.f32 %v2401, %v2403
        %v2405 = vadd.f32 %v2401, %v2404
        %vm2406 = vweird.f32 %v2399
        %vm2407 = vweird.f32 %v2401
        %vm2408 = vmor %vm2406, %vm2407
        %v2409 = vsel %vm2408, %v2401, %v2405
        %v2410 = vand.u32 2147483647, %v2399
        %vm2411 = vcmp.eq.f32.partialorder %v2410, 8.507059e+37
        %v2412 = vand.u32 %v2399, 2147483648
        %v2413 = vor.u32 1.1754944e-38, %v2412
        %v2414 = vsel %vm2411, %v2413, %v2409
        %v2415 = vmul.f32 1.0, %v2414
        %v2416 = vrcp.pop %v2400
        %v2417 = vmul.f32 %v2400, %v2416
        %v2418 = vsub.f32 1.0, %v2417
        %v2419 = vmul.f32 %v2416, %v2418
        %v2420 = vadd.f32 %v2416, %v2419
        %vm2421 = vweird.f32 %v2400
        %vm2422 = vweird.f32 %v2416
        %vm2423 = vmor %vm2421, %vm2422
        %v2424 = vsel %vm2423, %v2416, %v2420
        %v2425 = vand.u32 2147483647, %v2400
        %vm2426 = vcmp.eq.f32.partialorder %v2425, 8.507059e+37
        %v2427 = vand.u32 %v2400, 2147483648
        %v2428 = vor.u32 1.1754944e-38, %v2427
        %v2429 = vsel %vm2426, %v2428, %v2424
        %v2430 = vmul.f32 1.0, %v2429
        %v2431 = vmul.f32 %v2377, %v2415
        %v2432 = vmul.f32 %v2392, %v2430
        %v2433 = vsub.f32 %v361, %v359
        %v2434 = vsub.f32 %v362, %v360
        %v2435 = vperm.slane %v2431, 0
        %v2436 = vperm.slane %v2432, 0
        %v2437 = vmul.f32 %v2435, %v2433
        %v2438 = vmul.f32 %v2436, %v2434
        %v2439 = vadd.f32 %v359, %v2437
        %v2440 = vadd.f32 %v360, %v2438
        %2441 = vst [vmem:[%s358] sm:$0xff] %v2439
        %2442 = vst [vmem:[%s358 + $0x8] sm:$0xff] %v2440
        %s2443 = sand.u32 %s171, 1
        %s2444 = scalar_lea.sflag [#allocation4], %s2443
        %s2445 = sand.u32 %s171, 1
        %s2446 = smul.addr %s2445, 16
        %s2447 = scalar_lea.vmem [#allocation11], %s2446
        // Predicated region
        $region65: #{tpu_custom_call.1} parent=43 // pred_check
          %p2448 = pneg %p181
        $region66: #{tpu_custom_call.1} parent=43 // pred_check_branch
          %2450 = sbr.rel (%p2448) target = $region68
        $region67: #{tpu_custom_call.1} parent=43 // pred_region
          %2452 = vsyncadd %s2444, 0
          %s2453 = smul.addr %s27, 2
          %s2454 = smul.addr %s2453, 8
          %s2455 = scalar_lea.hbm %s6, %s2454
          %s2457 = sshll.u32 %s2447, 4
          %s2458 = int_to_ptr.vmem [resolvable:$true] %s2457
          %s2459 = sshll.u32 %s2455, 4
          %s2460 = int_to_ptr.hbm [resolvable:$true] %s2459
          %2462 = dma.vmem_to_hbm [thread:$0]  %s2458, 256, %s2460, %s2444
        $region68: #{tpu_custom_call.1} parent=43 // pred_fallthru
          _
      $region44: #{tpu_custom_call.1} parent=5 // pred_fallthru
        _
      %p2463 = scmp.le.s32.totalorder 2, %s22
      // Predicated region
      $region69: #{tpu_custom_call.1} parent=5 // pred_check
        %p2464 = pneg %p2463
      $region70: #{tpu_custom_call.1} parent=5 // pred_check_branch
        %2466 = sbr.rel (%p2464) target = $region72
      $region71: #{tpu_custom_call.1} parent=5 // pred_region
        %s2467 = ssub.s32 %s22, 2
        // Predicated region
        $region73: #{tpu_custom_call.1} parent=71 // pred_check
          %p2468 = pneg %p187
        $region74: #{tpu_custom_call.1} parent=71 // pred_check_branch
          %2470 = sbr.rel (%p2468) target = $region76
        $region75: #{tpu_custom_call.1} parent=71 // pred_region
          %s2471 = sand.u32 %s172, 1
          %s2472 = scalar_lea.sflag [#allocation4], %s2471
          %s2473 = sand.u32 %s172, 1
          %s2474 = smul.addr %s2473, 16
          %s2475 = scalar_lea.vmem [#allocation11], %s2474
          %2477 = dma.done %s2472, 256
        $region76: #{tpu_custom_call.1} parent=71 // pred_fallthru
          _
      $region72: #{tpu_custom_call.1} parent=5 // pred_fallthru
        _
    $region6: #{tpu_custom_call.1} parent=1 // loop_footer
      %s26 = sadd.s32 1, %s22
    $region7: #{tpu_custom_call.1} parent=1 // loop_footer_branch
      %21 = sbr.rel target = $region3
    $region8: #{tpu_custom_call.1} parent=1 // loop_exit
      _
    %2478 = vsyncpa [#allocation3], 1
    %s2479 = scalar_lea.sflag [#allocation3], 1
    %2480 = vsyncpa %s2479, 1
    %2481 = vsyncpa [#allocation6], 1
    %s2482 = scalar_lea.sflag [#allocation6], 1
    %2483 = vsyncpa %s2482, 1
    %2484 = vsyncpa [#allocation9], 1
    %2485 = vsyncpa [#allocation4], 1
    %s2486 = scalar_lea.sflag [#allocation4], 1
    %2487 = vsyncpa %s2486, 1

</llo_original>
